<compile_context>
chip_gen: v6e
topology: v6e:2x2x1
jax: 0.10.0
libtpu: 0.0.40
codegen_flags: <defaults>
</compile_context>

<pallas_src>
import functools
import math

import jax
import jax.numpy as jnp
from jax import lax
from jax.experimental import pallas as pl
from jax.experimental.pallas import tpu as pltpu

LN_EPS = 1e-5  # PyTorch nn.LayerNorm default


def _layernorm_f32(x, gamma, beta):
    mu = jnp.mean(x, axis=-1, keepdims=True)
    var = jnp.mean(jnp.square(x - mu), axis=-1, keepdims=True)
    return (x - mu) * lax.rsqrt(var + LN_EPS) * gamma + beta


# --------------------------------------------------------------------------
# Kernel 1: self-attention + residual-1.  grid = (batch, S // tq)
#   - q-tile axis carries a per-batch K/V VMEM scratch (filled at qi == 0).
# --------------------------------------------------------------------------
def attn_res1_kernel(xq_ref, xkv_ref, mask_ref,
                     wq_ref, bq_ref, wkv_ref, bkv_ref, wo_ref, bo_ref,
                     res1_ref, k_scr, v_scr, *, num_heads):
    qi = pl.program_id(1)
    d_model = xq_ref.shape[-1]
    depth = d_model // num_heads
    scale = 1.0 / math.sqrt(depth)

    # ---- per-batch K/V projection (fused Wk|Wv matmul), once per batch ----
    @pl.when(qi == 0)
    def _fill_kv():
        xkv = xkv_ref[0]                                     # (S, d_model)
        kv = jnp.dot(xkv, wkv_ref[...], preferred_element_type=jnp.float32)
        kv = kv + bkv_ref[...].astype(jnp.float32)           # (S, 2*d_model)
        for h in range(num_heads):                            # once per batch
            k_scr[h] = kv[:, h * depth:(h + 1) * depth]
            v_scr[h] = kv[:, d_model + h * depth: d_model + (h + 1) * depth]

    # ---- Q projection for this q tile (scale folded into q once) ----------
    xq = xq_ref[0]                                           # (tq, d_model)
    q = jnp.dot(xq, wq_ref[...], preferred_element_type=jnp.float32)
    q = (q + bq_ref[...].astype(jnp.float32)) * scale
    q_heads = jnp.stack(
        [q[:, h * depth:(h + 1) * depth] for h in range(num_heads)], axis=0)
    # q_heads: (H, tq, depth)

    # ---- batched (over heads) attention ------------------------------------
    k = k_scr[...]                                           # (H, S, depth) f32
    v = v_scr[...]
    s = jnp.einsum('hqd,hkd->hqk', q_heads, k,
                   preferred_element_type=jnp.float32)       # (H, tq, S)
    masked = mask_ref[0] == 0                                # (tq, S) bool
    s = jnp.where(masked[None], -1e9, s)                     # matches masked_fill
    m = jnp.max(s, axis=-1, keepdims=True)
    p = jnp.exp(s - m)
    denom = jnp.sum(p, axis=-1, keepdims=True)
    p = p * pl.reciprocal(denom, approx=True)                # EUP, not VALU divide
    # dropout on attention probabilities: identity (eval mode)
    ctx = jnp.einsum('hqk,hkd->hqd', p, v,
                     preferred_element_type=jnp.float32)     # (H, tq, depth)

    # ---- output projection: accumulate per-head matmuls (no lane concat) ---
    attn = bo_ref[...].astype(jnp.float32)                   # (1, d_model)
    for h in range(num_heads):
        attn = attn + jnp.dot(ctx[h].astype(wo_ref.dtype), wo_ref[h],
                              preferred_element_type=jnp.float32)

    # residual-1 (dropout1 = identity).  LayerNorm1 is recomputed in kernel 2.
    res1_ref[0] = (xq.astype(jnp.float32) + attn).astype(res1_ref.dtype)


# --------------------------------------------------------------------------
# Kernel 2: LayerNorm1 (recomputed once per row tile) + FFN (d_ff-tiled
# reduction into an f32 accumulator, b2 folded into init) + residual-2 + LN2.
# grid = (rows // tm, d_ff // t_ff)
# --------------------------------------------------------------------------
def ffn_ln_kernel(res1_ref, w1_ref, b1_ref, w2_ref, b2_ref,
                  g1_ref, beta1_ref, g2_ref, beta2_ref,
                  o_ref, acc_ref, ln1_scr):
    j = pl.program_id(1)

    @pl.when(j == 0)
    def _init():
        r1 = res1_ref[...].astype(jnp.float32)
        ln1 = _layernorm_f32(r1, g1_ref[...].astype(jnp.float32),
                             beta1_ref[...].astype(jnp.float32))
        ln1_scr[...] = ln1.astype(ln1_scr.dtype)
        # Fold the b2 bias into the accumulator init (saves a full-tile pass).
        acc_ref[...] = jnp.broadcast_to(
            b2_ref[...].astype(jnp.float32), acc_ref.shape)

    # linear1 chunk + ReLU (dropout = identity, eval mode)
    hid = jnp.dot(ln1_scr[...], w1_ref[...], preferred_element_type=jnp.float32)
    hid = jnp.maximum(hid + b1_ref[...].astype(jnp.float32), 0.0)
    # partial linear2 accumulated into the f32 VMEM scratch
    acc_ref[...] += jnp.dot(hid.astype(w2_ref.dtype), w2_ref[...],
                            preferred_element_type=jnp.float32)

    @pl.when(j == pl.num_programs(1) - 1)
    def _finalize():
        res2 = res1_ref[...].astype(jnp.float32) + acc_ref[...]
        out = _layernorm_f32(res2, g2_ref[...].astype(jnp.float32),
                             beta2_ref[...].astype(jnp.float32))
        o_ref[...] = out.astype(o_ref.dtype)


# --------------------------------------------------------------------------
# Wrapper
# --------------------------------------------------------------------------
def _pick_row_tile(total, target):
    """Largest multiple of 8 that divides `total` and is <= target (else total)."""
    t = min(target, total)
    t -= t % 8
    while t >= 8 and total % t != 0:
        t -= 8
    return t if t >= 8 and total % t == 0 else total


def _pick_col_tile(total, target):
    """Largest multiple of 128 that divides `total` and is <= target (else total)."""
    t = min(target, total)
    if t == total:
        return t
    t -= t % 128
    while t >= 128 and total % t != 0:
        t -= 128
    return t if t >= 128 and total % t == 0 else total


def _physical_vmem_bytes():
    try:
        info = pltpu.get_tpu_info()
        v = getattr(info, "vmem_capacity_bytes", None)
        if v:
            return int(v)
    except Exception:
        pass
    return 64 * 1024 * 1024   # conservative (v7x-sized) default


def encoder_layer(x, mask, params, num_heads, *, tq=None, tm=None, t_ff=None):
    """x: [B, S, d_model], mask: [B, S, S] (nonzero = keep) -> [B, S, d_model]."""
    B, S, d_model = x.shape
    d_ff = params["w1"].shape[1]
    depth = d_model // num_heads
    assert d_model % num_heads == 0
    assert d_model % 128 == 0, "keep the lane dim 128-aligned"
    dtype = x.dtype
    isz = dtype.itemsize

    # Generation-aware defaults: big tiles / larger scoped VMEM on 128 MiB
    # parts (v5e/v6e); conservative tiles on 64 MiB parts (v7x).
    big_vmem = _physical_vmem_bytes() >= 100 * 1024 * 1024
    vmem_limit = (64 if big_vmem else 32) * 1024 * 1024
    tq = _pick_row_tile(S, tq if tq is not None else (512 if big_vmem else 256))
    n_q = S // tq

    def row2d(v):
        return v.reshape(1, -1)

    # Fused K|V weight (one wide matmul per batch) and per-head Wo slabs.
    w_kv = jnp.concatenate([params["wk"], params["wv"]], axis=1)   # (d, 2d)
    b_kv = row2d(jnp.concatenate([params["bk"], params["bv"]]))    # (1, 2d)
    wo_h = params["wo"].reshape(num_heads, depth, d_model)         # (H, depth, d)

    # ---------------- Kernel 1: MHA + residual-1 ----------------------------
    attn_flops = B * (8 * S * d_model * d_model + 4 * S * S * d_model)
    attn_bytes = int(2 * B * S * d_model * isz            # x (q rows + kv rows)
                     + mask.nbytes
                     + 4 * d_model * d_model * isz        # Wq + Wk|Wv + Wo
                     + B * S * d_model * isz)             # res1 write

    cspec = lambda shape: pl.BlockSpec(shape, lambda b, i: (0,) * len(shape))

    res1 = pl.pallas_call(
        functools.partial(attn_res1_kernel, num_heads=num_heads),
        out_shape=jax.ShapeDtypeStruct((B, S, d_model), dtype),
        grid_spec=pltpu.PrefetchScalarGridSpec(
            num_scalar_prefetch=0,
            grid=(B, n_q),
            in_specs=[
                pl.BlockSpec((1, tq, d_model), lambda b, i: (b, i, 0)),   # x (q rows)
                pl.BlockSpec((1, S, d_model), lambda b, i: (b, 0, 0)),    # x (kv rows)
                pl.BlockSpec((1, tq, S), lambda b, i: (b, i, 0)),         # mask tile
                cspec((d_model, d_model)),                                # Wq
                cspec((1, d_model)),                                      # bq
                cspec((d_model, 2 * d_model)),                            # Wk|Wv
                cspec((1, 2 * d_model)),                                  # bk|bv
                cspec((num_heads, depth, d_model)),                       # Wo per head
                cspec((1, d_model)),                                      # bo
            ],
            out_specs=pl.BlockSpec((1, tq, d_model), lambda b, i: (b, i, 0)),
            scratch_shapes=[pltpu.VMEM((num_heads, S, depth), jnp.float32),
                            pltpu.VMEM((num_heads, S, depth), jnp.float32)],
        ),
        # Batch axis parallel (megacore); q-tile axis arbitrary because the
        # K/V scratch is carried across it (filled at qi == 0 per batch).
        compiler_params=pltpu.CompilerParams(
            dimension_semantics=("parallel", "arbitrary"),
            vmem_limit_bytes=vmem_limit),
        cost_estimate=pl.CostEstimate(
            flops=attn_flops,
            transcendentals=B * num_heads * S * S,
            bytes_accessed=attn_bytes),
    )(x, x, mask,
      params["wq"], row2d(params["bq"]),
      w_kv, b_kv, wo_h, row2d(params["bo"]))

    # ------------- Kernel 2: LN1 + FFN + residual-2 + LN2 (row tiled) -------
    M = B * S
    tm = _pick_row_tile(M, tm if tm is not None else (512 if big_vmem else 256))
    t_ff = _pick_col_tile(d_ff, t_ff if t_ff is not None else (1024 if big_vmem else 512))

    res1_2d = res1.reshape(M, d_model)

    ffn_flops = 4 * M * d_model * d_ff
    ffn_bytes = int(M * d_model * isz                      # res1 read
                    + 2 * d_model * d_ff * isz             # W1 + W2
                    + M * d_model * isz)                   # out write

    out2d = pl.pallas_call(
        ffn_ln_kernel,
        out_shape=jax.ShapeDtypeStruct((M, d_model), dtype),
        grid_spec=pltpu.PrefetchScalarGridSpec(
            num_scalar_prefetch=0,
            grid=(M // tm, d_ff // t_ff),
            in_specs=[
                pl.BlockSpec((tm, d_model), lambda i, j: (i, 0)),    # res1 rows
                pl.BlockSpec((d_model, t_ff), lambda i, j: (0, j)),  # W1 chunk
                pl.BlockSpec((1, t_ff), lambda i, j: (0, j)),        # b1 chunk
                pl.BlockSpec((t_ff, d_model), lambda i, j: (j, 0)),  # W2 chunk
                pl.BlockSpec((1, d_model), lambda i, j: (0, 0)),     # b2
                pl.BlockSpec((1, d_model), lambda i, j: (0, 0)),     # gamma1
                pl.BlockSpec((1, d_model), lambda i, j: (0, 0)),     # beta1
                pl.BlockSpec((1, d_model), lambda i, j: (0, 0)),     # gamma2
                pl.BlockSpec((1, d_model), lambda i, j: (0, 0)),     # beta2
            ],
            out_specs=pl.BlockSpec((tm, d_model), lambda i, j: (i, 0)),
            scratch_shapes=[pltpu.VMEM((tm, d_model), jnp.float32),
                            pltpu.VMEM((tm, d_model), params["w1"].dtype)],
        ),
        compiler_params=pltpu.CompilerParams(
            dimension_semantics=("parallel", "arbitrary"),
            vmem_limit_bytes=vmem_limit),
        cost_estimate=pl.CostEstimate(
            flops=ffn_flops, transcendentals=0, bytes_accessed=ffn_bytes),
    )(res1_2d,
      params["w1"], row2d(params["b1"]),
      params["w2"], row2d(params["b2"]),
      row2d(params["gamma1"]), row2d(params["beta1"]),
      row2d(params["gamma2"]), row2d(params["beta2"]))

    return out2d.reshape(B, S, d_model)


# --------------------------------------------------------------------------
# Parameter init (mimics nn.Linear / nn.LayerNorm; weights stored [in, out])
# --------------------------------------------------------------------------
def init_params(key, d_model, d_ff, dtype=jnp.float32):
    ks = jax.random.split(key, 16)

    def linear(kw, kb, fan_in, fan_out):
        lim = 1.0 / math.sqrt(fan_in)
        w = jax.random.uniform(kw, (fan_in, fan_out), dtype, -lim, lim)
        b = jax.random.uniform(kb, (fan_out,), dtype, -lim, lim)
        return w, b

    wq, bq = linear(ks[0], ks[1], d_model, d_model)
    wk, bk = linear(ks[2], ks[3], d_model, d_model)
    wv, bv = linear(ks[4], ks[5], d_model, d_model)
    wo, bo = linear(ks[6], ks[7], d_model, d_model)
    w1, b1 = linear(ks[8], ks[9], d_model, d_ff)
    w2, b2 = linear(ks[10], ks[11], d_ff, d_model)
    gamma1 = (1.0 + 0.1 * jax.random.normal(ks[12], (d_model,))).astype(dtype)
    beta1 = (0.1 * jax.random.normal(ks[13], (d_model,))).astype(dtype)
    gamma2 = (1.0 + 0.1 * jax.random.normal(ks[14], (d_model,))).astype(dtype)
    beta2 = (0.1 * jax.random.normal(ks[15], (d_model,))).astype(dtype)
    return dict(wq=wq, bq=bq, wk=wk, bk=bk, wv=wv, bv=bv, wo=wo, bo=bo,
                w1=w1, b1=b1, w2=w2, b2=b2,
                gamma1=gamma1, beta1=beta1, gamma2=gamma2, beta2=beta2)


# --------------------------------------------------------------------------
# Pure-JAX reference (same math, eval-mode dropout)
# --------------------------------------------------------------------------
def encoder_layer_ref(x, mask, p, num_heads):
    B, S, d_model = x.shape
    depth = d_model // num_heads
    hp = lax.Precision.HIGHEST

    def lin(t, w, b):
        return jnp.dot(t, w, precision=hp) + b

    def split(t):
        return t.reshape(B, S, num_heads, depth).transpose(0, 2, 1, 3)

    q = split(lin(x, p["wq"], p["bq"]))
    k = split(lin(x, p["wk"], p["bk"]))
    v = split(lin(x, p["wv"], p["bv"]))
    scores = jnp.einsum("bhqd,bhkd->bhqk", q, k, precision=hp) / math.sqrt(depth)
    scores = jnp.where(mask[:, None, :, :] == 0, -1e9, scores)
    probs = jax.nn.softmax(scores, axis=-1)
    ctx = jnp.einsum("bhqk,bhkd->bhqd", probs, v, precision=hp)
    ctx = ctx.transpose(0, 2, 1, 3).reshape(B, S, d_model)
    attn = lin(ctx, p["wo"], p["bo"])

    def layernorm(t, g, b):
        mu = jnp.mean(t, axis=-1, keepdims=True)
        var = jnp.mean(jnp.square(t - mu), axis=-1, keepdims=True)
        return (t - mu) / jnp.sqrt(var + LN_EPS) * g + b

    r1 = x + attn
    n1 = layernorm(r1, p["gamma1"], p["beta1"])
    f = lin(jnp.maximum(lin(n1, p["w1"], p["b1"]), 0.0), p["w2"], p["b2"])
    r2 = r1 + f
    return layernorm(r2, p["gamma2"], p["beta2"])


if __name__ == "__main__":
    d_model, num_heads, d_ff = 128, 4, 256
    B, S = 2, 16

    key = jax.random.PRNGKey(0)
    kx, kp = jax.random.split(key)
    x = jax.random.normal(kx, (B, S, d_model), jnp.float32)

    # Padding-style mask: batch 0 sees all S keys, batch 1 only the first S-4.
    lengths = jnp.array([S, S - 4])
    key_pos = jnp.arange(S)
    mask = (key_pos[None, None, :] < lengths[:, None, None]).astype(jnp.float32)
    mask = jnp.broadcast_to(mask, (B, S, S))

    params = init_params(kp, d_model, d_ff)

    out = encoder_layer(x, mask, params, num_heads)
    out = jax.block_until_ready(out)

    ref = encoder_layer_ref(x, mask, params, num_heads)
    assert out.shape == (B, S, d_model)
    max_err = float(jnp.max(jnp.abs(out - ref)))
    # Tolerance accounts for the approximate (EUP) softmax reciprocal and
    # MXU accumulation-order differences vs the HIGHEST-precision reference.
    assert jnp.allclose(out, ref, atol=2e-2, rtol=2e-2), f"max abs err {max_err}"

    print("KERNEL_OK")
</pallas_src>

<mosaic_0001>
module attributes {stable_mosaic.version = 11 : i64} {
  func.func @attn_res1_kernel(%arg0: i32, %arg1: i32, %arg2: memref<1x16x128xf32, #tpu.memory_space<vmem>>, %arg3: memref<1x16x128xf32, #tpu.memory_space<vmem>>, %arg4: memref<1x16x16xf32, #tpu.memory_space<vmem>>, %arg5: memref<128x128xf32, #tpu.memory_space<vmem>>, %arg6: memref<1x128xf32, #tpu.memory_space<vmem>>, %arg7: memref<128x256xf32, #tpu.memory_space<vmem>>, %arg8: memref<1x256xf32, #tpu.memory_space<vmem>>, %arg9: memref<4x32x128xf32, #tpu.memory_space<vmem>>, %arg10: memref<1x128xf32, #tpu.memory_space<vmem>>, %arg11: memref<1x16x128xf32, #tpu.memory_space<vmem>>, %arg12: memref<4x16x32xf32, #tpu.memory_space<vmem>>, %arg13: memref<4x16x32xf32, #tpu.memory_space<vmem>>) attributes {dimension_semantics = [#tpu.dimension_semantics<parallel>, #tpu.dimension_semantics<arbitrary>], iteration_bounds = array<i64: 2, 1>, scalar_prefetch = 0 : i64, scratch_operands = 2 : i64, tpu.core_type = #tpu.core_type<tc>, window_params = [{transform_indices = @transform_0, window_bounds = array<i64: 1, 16, 128>}, {transform_indices = @transform_1, window_bounds = array<i64: 1, 16, 128>}, {transform_indices = @transform_2, window_bounds = array<i64: 1, 16, 16>}, {pipeline_mode = #tpu.pipeline_mode<synchronous>, transform_indices = @transform_3, window_bounds = array<i64: 128, 128>}, {pipeline_mode = #tpu.pipeline_mode<synchronous>, transform_indices = @transform_4, window_bounds = array<i64: 1, 128>}, {pipeline_mode = #tpu.pipeline_mode<synchronous>, transform_indices = @transform_5, window_bounds = array<i64: 128, 256>}, {pipeline_mode = #tpu.pipeline_mode<synchronous>, transform_indices = @transform_6, window_bounds = array<i64: 1, 256>}, {pipeline_mode = #tpu.pipeline_mode<synchronous>, transform_indices = @transform_7, window_bounds = array<i64: 4, 32, 128>}, {pipeline_mode = #tpu.pipeline_mode<synchronous>, transform_indices = @transform_8, window_bounds = array<i64: 1, 128>}, {transform_indices = @transform_9, window_bounds = array<i64: 1, 16, 128>}]} {
    %c0_i32 = arith.constant 0 : i32
    %0 = arith.cmpi eq, %arg1, %c0_i32 : i32
    %1 = arith.extui %0 : i1 to i32
    %c0_i32_0 = arith.constant 0 : i32
    %2 = arith.cmpi ne, %1, %c0_i32_0 : i32
    scf.if %2 {
      %c0_41 = arith.constant 0 : index
      %c0_42 = arith.constant 0 : index
      %c0_43 = arith.constant 0 : index
      %74 = vector.load %arg3[%c0_41, %c0_42, %c0_43] : memref<1x16x128xf32, #tpu.memory_space<vmem>>, vector<1x16x128xf32>
      %75 = vector.shape_cast %74 : vector<1x16x128xf32> to vector<16x128xf32>
      %c0_44 = arith.constant 0 : index
      %c0_45 = arith.constant 0 : index
      %76 = vector.load %arg7[%c0_44, %c0_45] : memref<128x256xf32, #tpu.memory_space<vmem>>, vector<128x256xf32>
      %cst_46 = arith.constant dense<0.000000e+00> : vector<16x256xf32>
      %77 = tpu.matmul %75, %76, %cst_46 {dimension_numbers = #tpu.dot_dimension_numbers<[1], [0], [0], [1], [0, 0, 1, 1], [], []>} : vector<16x128xf32>, vector<128x256xf32>, vector<16x256xf32> -> vector<16x256xf32>
      %c0_47 = arith.constant 0 : index
      %c0_48 = arith.constant 0 : index
      %78 = vector.load %arg8[%c0_47, %c0_48] : memref<1x256xf32, #tpu.memory_space<vmem>>, vector<1x256xf32>
      %79 = vector.broadcast %78 : vector<1x256xf32> to vector<16x256xf32>
      %80 = arith.addf %77, %79 : vector<16x256xf32>
      %81 = vector.extract_strided_slice %80 {offsets = [0, 0], sizes = [16, 32], strides = [1, 1]} : vector<16x256xf32> to vector<16x32xf32>
      %c0_49 = arith.constant 0 : index
      %c0_50 = arith.constant 0 : index
      %c0_51 = arith.constant 0 : index
      %82 = vector.load %arg12[%c0_49, %c0_50, %c0_51] : memref<4x16x32xf32, #tpu.memory_space<vmem>>, vector<1x16x32xf32>
      %83 = vector.shape_cast %82 : vector<1x16x32xf32> to vector<16x32xf32>
      %84 = vector.shape_cast %81 : vector<16x32xf32> to vector<1x16x32xf32>
      tpu.vector_store %arg12[%c0_49, %c0_50, %c0_51], %84 {strides = array<i32>} : memref<4x16x32xf32, #tpu.memory_space<vmem>>, vector<1x16x32xf32>,
      %85 = vector.extract_strided_slice %80 {offsets = [0, 128], sizes = [16, 32], strides = [1, 1]} : vector<16x256xf32> to vector<16x32xf32>
      %c0_52 = arith.constant 0 : index
      %c0_53 = arith.constant 0 : index
      %c0_54 = arith.constant 0 : index
      %86 = vector.load %arg13[%c0_52, %c0_53, %c0_54] : memref<4x16x32xf32, #tpu.memory_space<vmem>>, vector<1x16x32xf32>
      %87 = vector.shape_cast %86 : vector<1x16x32xf32> to vector<16x32xf32>
      %88 = vector.shape_cast %85 : vector<16x32xf32> to vector<1x16x32xf32>
      tpu.vector_store %arg13[%c0_52, %c0_53, %c0_54], %88 {strides = array<i32>} : memref<4x16x32xf32, #tpu.memory_space<vmem>>, vector<1x16x32xf32>,
      %89 = vector.extract_strided_slice %80 {offsets = [0, 32], sizes = [16, 32], strides = [1, 1]} : vector<16x256xf32> to vector<16x32xf32>
      %c1_55 = arith.constant 1 : index
      %c0_56 = arith.constant 0 : index
      %c0_57 = arith.constant 0 : index
      %90 = vector.load %arg12[%c1_55, %c0_56, %c0_57] : memref<4x16x32xf32, #tpu.memory_space<vmem>>, vector<1x16x32xf32>
      %91 = vector.shape_cast %90 : vector<1x16x32xf32> to vector<16x32xf32>
      %92 = vector.shape_cast %89 : vector<16x32xf32> to vector<1x16x32xf32>
      tpu.vector_store %arg12[%c1_55, %c0_56, %c0_57], %92 {strides = array<i32>} : memref<4x16x32xf32, #tpu.memory_space<vmem>>, vector<1x16x32xf32>,
      %93 = vector.extract_strided_slice %80 {offsets = [0, 160], sizes = [16, 32], strides = [1, 1]} : vector<16x256xf32> to vector<16x32xf32>
      %c1_58 = arith.constant 1 : index
      %c0_59 = arith.constant 0 : index
      %c0_60 = arith.constant 0 : index
      %94 = vector.load %arg13[%c1_58, %c0_59, %c0_60] : memref<4x16x32xf32, #tpu.memory_space<vmem>>, vector<1x16x32xf32>
      %95 = vector.shape_cast %94 : vector<1x16x32xf32> to vector<16x32xf32>
      %96 = vector.shape_cast %93 : vector<16x32xf32> to vector<1x16x32xf32>
      tpu.vector_store %arg13[%c1_58, %c0_59, %c0_60], %96 {strides = array<i32>} : memref<4x16x32xf32, #tpu.memory_space<vmem>>, vector<1x16x32xf32>,
      %97 = vector.extract_strided_slice %80 {offsets = [0, 64], sizes = [16, 32], strides = [1, 1]} : vector<16x256xf32> to vector<16x32xf32>
      %c2_61 = arith.constant 2 : index
      %c0_62 = arith.constant 0 : index
      %c0_63 = arith.constant 0 : index
      %98 = vector.load %arg12[%c2_61, %c0_62, %c0_63] : memref<4x16x32xf32, #tpu.memory_space<vmem>>, vector<1x16x32xf32>
      %99 = vector.shape_cast %98 : vector<1x16x32xf32> to vector<16x32xf32>
      %100 = vector.shape_cast %97 : vector<16x32xf32> to vector<1x16x32xf32>
      tpu.vector_store %arg12[%c2_61, %c0_62, %c0_63], %100 {strides = array<i32>} : memref<4x16x32xf32, #tpu.memory_space<vmem>>, vector<1x16x32xf32>,
      %101 = vector.extract_strided_slice %80 {offsets = [0, 192], sizes = [16, 32], strides = [1, 1]} : vector<16x256xf32> to vector<16x32xf32>
      %c2_64 = arith.constant 2 : index
      %c0_65 = arith.constant 0 : index
      %c0_66 = arith.constant 0 : index
      %102 = vector.load %arg13[%c2_64, %c0_65, %c0_66] : memref<4x16x32xf32, #tpu.memory_space<vmem>>, vector<1x16x32xf32>
      %103 = vector.shape_cast %102 : vector<1x16x32xf32> to vector<16x32xf32>
      %104 = vector.shape_cast %101 : vector<16x32xf32> to vector<1x16x32xf32>
      tpu.vector_store %arg13[%c2_64, %c0_65, %c0_66], %104 {strides = array<i32>} : memref<4x16x32xf32, #tpu.memory_space<vmem>>, vector<1x16x32xf32>,
      %105 = vector.extract_strided_slice %80 {offsets = [0, 96], sizes = [16, 32], strides = [1, 1]} : vector<16x256xf32> to vector<16x32xf32>
      %c3_67 = arith.constant 3 : index
      %c0_68 = arith.constant 0 : index
      %c0_69 = arith.constant 0 : index
      %106 = vector.load %arg12[%c3_67, %c0_68, %c0_69] : memref<4x16x32xf32, #tpu.memory_space<vmem>>, vector<1x16x32xf32>
      %107 = vector.shape_cast %106 : vector<1x16x32xf32> to vector<16x32xf32>
      %108 = vector.shape_cast %105 : vector<16x32xf32> to vector<1x16x32xf32>
      tpu.vector_store %arg12[%c3_67, %c0_68, %c0_69], %108 {strides = array<i32>} : memref<4x16x32xf32, #tpu.memory_space<vmem>>, vector<1x16x32xf32>,
      %109 = vector.extract_strided_slice %80 {offsets = [0, 224], sizes = [16, 32], strides = [1, 1]} : vector<16x256xf32> to vector<16x32xf32>
      %c3_70 = arith.constant 3 : index
      %c0_71 = arith.constant 0 : index
      %c0_72 = arith.constant 0 : index
      %110 = vector.load %arg13[%c3_70, %c0_71, %c0_72] : memref<4x16x32xf32, #tpu.memory_space<vmem>>, vector<1x16x32xf32>
      %111 = vector.shape_cast %110 : vector<1x16x32xf32> to vector<16x32xf32>
      %112 = vector.shape_cast %109 : vector<16x32xf32> to vector<1x16x32xf32>
      tpu.vector_store %arg13[%c3_70, %c0_71, %c0_72], %112 {strides = array<i32>} : memref<4x16x32xf32, #tpu.memory_space<vmem>>, vector<1x16x32xf32>,
    } else {
    }
    %c0 = arith.constant 0 : index
    %c0_1 = arith.constant 0 : index
    %c0_2 = arith.constant 0 : index
    %3 = vector.load %arg2[%c0, %c0_1, %c0_2] : memref<1x16x128xf32, #tpu.memory_space<vmem>>, vector<1x16x128xf32>
    %4 = vector.shape_cast %3 : vector<1x16x128xf32> to vector<16x128xf32>
    %c0_3 = arith.constant 0 : index
    %c0_4 = arith.constant 0 : index
    %5 = vector.load %arg5[%c0_3, %c0_4] : memref<128x128xf32, #tpu.memory_space<vmem>>, vector<128x128xf32>
    %cst = arith.constant dense<0.000000e+00> : vector<16x128xf32>
    %6 = tpu.matmul %4, %5, %cst {dimension_numbers = #tpu.dot_dimension_numbers<[1], [0], [0], [1], [0, 0, 1, 1], [], []>} : vector<16x128xf32>, vector<128x128xf32>, vector<16x128xf32> -> vector<16x128xf32>
    %c0_5 = arith.constant 0 : index
    %c0_6 = arith.constant 0 : index
    %7 = vector.load %arg6[%c0_5, %c0_6] : memref<1x128xf32, #tpu.memory_space<vmem>>, vector<1x128xf32>
    %8 = vector.broadcast %7 : vector<1x128xf32> to vector<16x128xf32>
    %9 = arith.addf %6, %8 : vector<16x128xf32>
    %cst_7 = arith.constant 0.176776692 : f32
    %10 = vector.broadcast %cst_7 : f32 to vector<16x128xf32>
    %11 = arith.mulf %9, %10 : vector<16x128xf32>
    %12 = vector.extract_strided_slice %11 {offsets = [0, 0], sizes = [16, 32], strides = [1, 1]} : vector<16x128xf32> to vector<16x32xf32>
    %13 = vector.extract_strided_slice %11 {offsets = [0, 32], sizes = [16, 32], strides = [1, 1]} : vector<16x128xf32> to vector<16x32xf32>
    %14 = vector.extract_strided_slice %11 {offsets = [0, 64], sizes = [16, 32], strides = [1, 1]} : vector<16x128xf32> to vector<16x32xf32>
    %15 = vector.extract_strided_slice %11 {offsets = [0, 96], sizes = [16, 32], strides = [1, 1]} : vector<16x128xf32> to vector<16x32xf32>
    %16 = vector.shape_cast %12 : vector<16x32xf32> to vector<1x16x32xf32>
    %17 = vector.shape_cast %13 : vector<16x32xf32> to vector<1x16x32xf32>
    %18 = vector.shape_cast %14 : vector<16x32xf32> to vector<1x16x32xf32>
    %19 = vector.shape_cast %15 : vector<16x32xf32> to vector<1x16x32xf32>
    %20 = tpu.concatenate %16, %17, %18, %19 in 0 : vector<1x16x32xf32>, vector<1x16x32xf32>, vector<1x16x32xf32>, vector<1x16x32xf32> -> vector<4x16x32xf32>
    %c0_8 = arith.constant 0 : index
    %c0_9 = arith.constant 0 : index
    %c0_10 = arith.constant 0 : index
    %21 = vector.load %arg12[%c0_8, %c0_9, %c0_10] : memref<4x16x32xf32, #tpu.memory_space<vmem>>, vector<4x16x32xf32>
    %c0_11 = arith.constant 0 : index
    %c0_12 = arith.constant 0 : index
    %c0_13 = arith.constant 0 : index
    %22 = vector.load %arg13[%c0_11, %c0_12, %c0_13] : memref<4x16x32xf32, #tpu.memory_space<vmem>>, vector<4x16x32xf32>
    "tpu.trace_start"() <{level = 10 : i32, message = "hqd,hkd->hqk"}> : () -> ()
    %cst_14 = arith.constant dense<0.000000e+00> : vector<4x16x16xf32>
    %23 = tpu.matmul %20, %21, %cst_14 {dimension_numbers = #tpu.dot_dimension_numbers<[2], [2], [1], [1], [0, 0, 0, 1, 1, 1], [0], [0]>} : vector<4x16x32xf32>, vector<4x16x32xf32>, vector<4x16x16xf32> -> vector<4x16x16xf32>
    "tpu.trace_stop"() : () -> ()
    %c0_15 = arith.constant 0 : index
    %c0_16 = arith.constant 0 : index
    %c0_17 = arith.constant 0 : index
    %24 = vector.load %arg4[%c0_15, %c0_16, %c0_17] : memref<1x16x16xf32, #tpu.memory_space<vmem>>, vector<1x16x16xf32>
    %25 = vector.shape_cast %24 : vector<1x16x16xf32> to vector<16x16xf32>
    %cst_18 = arith.constant 0.000000e+00 : f32
    %26 = vector.broadcast %cst_18 : f32 to vector<16x16xf32>
    %27 = arith.cmpf oeq, %25, %26 : vector<16x16xf32>
    %28 = vector.shape_cast %27 : vector<16x16xi1> to vector<1x16x16xi1>
    %cst_19 = arith.constant -1.000000e+09 : f32
    %29 = vector.shape_cast %28 : vector<1x16x16xi1> to vector<1x16x16xi1>
    %30 = vector.broadcast %29 : vector<1x16x16xi1> to vector<4x16x16xi1>
    %31 = vector.broadcast %cst_19 : f32 to vector<4x16x16xf32>
    %32 = arith.select %30, %31, %23 : vector<4x16x16xi1>, vector<4x16x16xf32>
    %cst_20 = arith.constant dense<0xFF800000> : vector<4x16xf32>
    %33 = vector.multi_reduction <maximumf>, %32, %cst_20 [2] : vector<4x16x16xf32> to vector<4x16xf32>
    %34 = vector.shape_cast %33 : vector<4x16xf32> to vector<4x16x1xf32>
    %35 = vector.broadcast %34 : vector<4x16x1xf32> to vector<4x16x16xf32>
    %36 = arith.subf %32, %35 : vector<4x16x16xf32>
    %37 = math.exp %36 : vector<4x16x16xf32>
    %cst_21 = arith.constant dense<0.000000e+00> : vector<4x16xf32>
    %38 = vector.multi_reduction <add>, %37, %cst_21 [2] : vector<4x16x16xf32> to vector<4x16xf32>
    %39 = vector.shape_cast %38 : vector<4x16xf32> to vector<4x16x1xf32>
    %40 = tpu.reciprocal %39 {approx = true} : vector<4x16x1xf32> -> vector<4x16x1xf32>
    %41 = vector.broadcast %40 : vector<4x16x1xf32> to vector<4x16x16xf32>
    %42 = arith.mulf %37, %41 : vector<4x16x16xf32>
    "tpu.trace_start"() <{level = 10 : i32, message = "hqk,hkd->hqd"}> : () -> ()
    %cst_22 = arith.constant dense<0.000000e+00> : vector<4x16x32xf32>
    %43 = tpu.matmul %42, %22, %cst_22 {dimension_numbers = #tpu.dot_dimension_numbers<[2], [1], [1], [2], [0, 0, 0, 1, 1, 2], [0], [0]>} : vector<4x16x16xf32>, vector<4x16x32xf32>, vector<4x16x32xf32> -> vector<4x16x32xf32>
    "tpu.trace_stop"() : () -> ()
    %c0_23 = arith.constant 0 : index
    %c0_24 = arith.constant 0 : index
    %44 = vector.load %arg10[%c0_23, %c0_24] : memref<1x128xf32, #tpu.memory_space<vmem>>, vector<1x128xf32>
    %45 = vector.extract_strided_slice %43 {offsets = [0, 0, 0], sizes = [1, 16, 32], strides = [1, 1, 1]} : vector<4x16x32xf32> to vector<1x16x32xf32>
    %46 = vector.shape_cast %45 : vector<1x16x32xf32> to vector<16x32xf32>
    %c0_25 = arith.constant 0 : index
    %c0_26 = arith.constant 0 : index
    %c0_27 = arith.constant 0 : index
    %47 = vector.load %arg9[%c0_25, %c0_26, %c0_27] : memref<4x32x128xf32, #tpu.memory_space<vmem>>, vector<1x32x128xf32>
    %48 = vector.shape_cast %47 : vector<1x32x128xf32> to vector<32x128xf32>
    %cst_28 = arith.constant dense<0.000000e+00> : vector<16x128xf32>
    %49 = tpu.matmul %46, %48, %cst_28 {dimension_numbers = #tpu.dot_dimension_numbers<[1], [0], [0], [1], [0, 0, 1, 1], [], []>} : vector<16x32xf32>, vector<32x128xf32>, vector<16x128xf32> -> vector<16x128xf32>
    %50 = vector.broadcast %44 : vector<1x128xf32> to vector<16x128xf32>
    %51 = arith.addf %50, %49 : vector<16x128xf32>
    %52 = vector.extract_strided_slice %43 {offsets = [1, 0, 0], sizes = [1, 16, 32], strides = [1, 1, 1]} : vector<4x16x32xf32> to vector<1x16x32xf32>
    %53 = vector.shape_cast %52 : vector<1x16x32xf32> to vector<16x32xf32>
    %c1 = arith.constant 1 : index
    %c0_29 = arith.constant 0 : index
    %c0_30 = arith.constant 0 : index
    %54 = vector.load %arg9[%c1, %c0_29, %c0_30] : memref<4x32x128xf32, #tpu.memory_space<vmem>>, vector<1x32x128xf32>
    %55 = vector.shape_cast %54 : vector<1x32x128xf32> to vector<32x128xf32>
    %cst_31 = arith.constant dense<0.000000e+00> : vector<16x128xf32>
    %56 = tpu.matmul %53, %55, %cst_31 {dimension_numbers = #tpu.dot_dimension_numbers<[1], [0], [0], [1], [0, 0, 1, 1], [], []>} : vector<16x32xf32>, vector<32x128xf32>, vector<16x128xf32> -> vector<16x128xf32>
    %57 = arith.addf %51, %56 : vector<16x128xf32>
    %58 = vector.extract_strided_slice %43 {offsets = [2, 0, 0], sizes = [1, 16, 32], strides = [1, 1, 1]} : vector<4x16x32xf32> to vector<1x16x32xf32>
    %59 = vector.shape_cast %58 : vector<1x16x32xf32> to vector<16x32xf32>
    %c2 = arith.constant 2 : index
    %c0_32 = arith.constant 0 : index
    %c0_33 = arith.constant 0 : index
    %60 = vector.load %arg9[%c2, %c0_32, %c0_33] : memref<4x32x128xf32, #tpu.memory_space<vmem>>, vector<1x32x128xf32>
    %61 = vector.shape_cast %60 : vector<1x32x128xf32> to vector<32x128xf32>
    %cst_34 = arith.constant dense<0.000000e+00> : vector<16x128xf32>
    %62 = tpu.matmul %59, %61, %cst_34 {dimension_numbers = #tpu.dot_dimension_numbers<[1], [0], [0], [1], [0, 0, 1, 1], [], []>} : vector<16x32xf32>, vector<32x128xf32>, vector<16x128xf32> -> vector<16x128xf32>
    %63 = arith.addf %57, %62 : vector<16x128xf32>
    %64 = vector.extract_strided_slice %43 {offsets = [3, 0, 0], sizes = [1, 16, 32], strides = [1, 1, 1]} : vector<4x16x32xf32> to vector<1x16x32xf32>
    %65 = vector.shape_cast %64 : vector<1x16x32xf32> to vector<16x32xf32>
    %c3 = arith.constant 3 : index
    %c0_35 = arith.constant 0 : index
    %c0_36 = arith.constant 0 : index
    %66 = vector.load %arg9[%c3, %c0_35, %c0_36] : memref<4x32x128xf32, #tpu.memory_space<vmem>>, vector<1x32x128xf32>
    %67 = vector.shape_cast %66 : vector<1x32x128xf32> to vector<32x128xf32>
    %cst_37 = arith.constant dense<0.000000e+00> : vector<16x128xf32>
    %68 = tpu.matmul %65, %67, %cst_37 {dimension_numbers = #tpu.dot_dimension_numbers<[1], [0], [0], [1], [0, 0, 1, 1], [], []>} : vector<16x32xf32>, vector<32x128xf32>, vector<16x128xf32> -> vector<16x128xf32>
    %69 = arith.addf %63, %68 : vector<16x128xf32>
    %70 = arith.addf %4, %69 : vector<16x128xf32>
    %c0_38 = arith.constant 0 : index
    %c0_39 = arith.constant 0 : index
    %c0_40 = arith.constant 0 : index
    %71 = vector.load %arg11[%c0_38, %c0_39, %c0_40] : memref<1x16x128xf32, #tpu.memory_space<vmem>>, vector<1x16x128xf32>
    %72 = vector.shape_cast %71 : vector<1x16x128xf32> to vector<16x128xf32>
    %73 = vector.shape_cast %70 : vector<16x128xf32> to vector<1x16x128xf32>
    tpu.vector_store %arg11[%c0_38, %c0_39, %c0_40], %73 {strides = array<i32>} : memref<1x16x128xf32, #tpu.memory_space<vmem>>, vector<1x16x128xf32>,
    return
  }
  func.func @transform_0(%arg0: i32, %arg1: i32) -> (i32, i32, i32) {
    %c0_i32 = arith.constant 0 : i32
    %c0_i32_0 = arith.constant 0 : i32
    return %arg0, %arg1, %c0_i32 : i32, i32, i32
  }
  func.func @transform_1(%arg0: i32, %arg1: i32) -> (i32, i32, i32) {
    %c0_i32 = arith.constant 0 : i32
    %c0_i32_0 = arith.constant 0 : i32
    %c0_i32_1 = arith.constant 0 : i32
    return %arg0, %c0_i32, %c0_i32_0 : i32, i32, i32
  }
  func.func @transform_2(%arg0: i32, %arg1: i32) -> (i32, i32, i32) {
    %c0_i32 = arith.constant 0 : i32
    %c0_i32_0 = arith.constant 0 : i32
    return %arg0, %arg1, %c0_i32 : i32, i32, i32
  }
  func.func @transform_3(%arg0: i32, %arg1: i32) -> (i32, i32) {
    %c0_i32 = arith.constant 0 : i32
    %c0_i32_0 = arith.constant 0 : i32
    %c0_i32_1 = arith.constant 0 : i32
    return %c0_i32, %c0_i32_0 : i32, i32
  }
  func.func @transform_4(%arg0: i32, %arg1: i32) -> (i32, i32) {
    %c0_i32 = arith.constant 0 : i32
    %c0_i32_0 = arith.constant 0 : i32
    %c0_i32_1 = arith.constant 0 : i32
    return %c0_i32, %c0_i32_0 : i32, i32
  }
  func.func @transform_5(%arg0: i32, %arg1: i32) -> (i32, i32) {
    %c0_i32 = arith.constant 0 : i32
    %c0_i32_0 = arith.constant 0 : i32
    %c0_i32_1 = arith.constant 0 : i32
    return %c0_i32, %c0_i32_0 : i32, i32
  }
  func.func @transform_6(%arg0: i32, %arg1: i32) -> (i32, i32) {
    %c0_i32 = arith.constant 0 : i32
    %c0_i32_0 = arith.constant 0 : i32
    %c0_i32_1 = arith.constant 0 : i32
    return %c0_i32, %c0_i32_0 : i32, i32
  }
  func.func @transform_7(%arg0: i32, %arg1: i32) -> (i32, i32, i32) {
    %c0_i32 = arith.constant 0 : i32
    %c0_i32_0 = arith.constant 0 : i32
    %c0_i32_1 = arith.constant 0 : i32
    %c0_i32_2 = arith.constant 0 : i32
    return %c0_i32, %c0_i32_0, %c0_i32_1 : i32, i32, i32
  }
  func.func @transform_8(%arg0: i32, %arg1: i32) -> (i32, i32) {
    %c0_i32 = arith.constant 0 : i32
    %c0_i32_0 = arith.constant 0 : i32
    %c0_i32_1 = arith.constant 0 : i32
    return %c0_i32, %c0_i32_0 : i32, i32
  }
  func.func @transform_9(%arg0: i32, %arg1: i32) -> (i32, i32, i32) {
    %c0_i32 = arith.constant 0 : i32
    %c0_i32_0 = arith.constant 0 : i32
    return %arg0, %arg1, %c0_i32 : i32, i32, i32
  }
}

</mosaic_0001>

<llo_original>
// kernel: tpu_custom_call.1
$region0: #{tpu_custom_call.1}
  #allocation0 [shape = 'u32[]', space=smem, size = 0x4, offset = 0x4, fixed_abs, tag = 'smem constant byte address 0x4 - core index']
  #allocation1 [shape = 'u32[144,128]{1,0:T(1,128)}', space=vmem, size = 0x12000, scoped, tag = 'internal scratch']
  #allocation2 [shape = 'f32[4,16,32]{2,1,0:T(8,128)}', space=vmem, size = 0x8000, scoped, tag = 'scratch operand']
  #allocation3 [shape = 'f32[4,16,32]{2,1,0:T(8,128)}', space=vmem, size = 0x8000, scoped, tag = 'scratch operand']
  %s0 = inlined_call_operand.hbm [shape: f32[2,16,128], index: 0, kind: input, shape index: {}]
  %s1 = inlined_call_operand.hbm [shape: f32[2,16,128], index: 1, kind: input, shape index: {}]
  %s2 = inlined_call_operand.hbm [shape: f32[2,16,16], index: 2, kind: input, shape index: {}]
  %s3 = inlined_call_operand.hbm [shape: f32[128,128], index: 3, kind: input, shape index: {}]
  %s4 = inlined_call_operand.vmem [shape: f32[1,128], index: 4, kind: input, shape index: {}]
  %s5 = inlined_call_operand.hbm [shape: f32[128,256], index: 5, kind: input, shape index: {}]
  %s6 = inlined_call_operand.vmem [shape: f32[1,256], index: 6, kind: input, shape index: {}]
  %s7 = inlined_call_operand.hbm [shape: f32[4,32,128], index: 7, kind: input, shape index: {}]
  %s8 = inlined_call_operand.vmem [shape: f32[1,128], index: 8, kind: input, shape index: {}]
  %s9 = inlined_call_operand.hbm [shape: f32[2,16,128], index: 9, kind: output, shape index: {}]
  %s10 = sld [smem:[#allocation0]]
  $region97: #{tpu_custom_call.1} parent=0
    _
  %s12 = ssub.s32 1, %s10
  %s13 = scalar_select 0, %s12, %s10
  $region1: #{tpu_custom_call.1} parent=0
    #allocation4 [shape = 'u8[16384]{0}', space=vmem, size = 0x4000, scoped, tag = 'input window, operand 0']
    #allocation5 [shape = 's32[2]{0}', space=sflag, size = 0x8, scoped, tag = 'scoped memory for tpu_custom_call.1']
    #allocation6 [shape = 's32[2]{0}', space=sflag, size = 0x8, scoped, tag = 'scoped memory for tpu_custom_call.1']
    #allocation7 [shape = 'u8[16384]{0}', space=vmem, size = 0x4000, scoped, tag = 'input window, operand 1']
    #allocation8 [shape = 's32[2]{0}', space=sflag, size = 0x8, scoped, tag = 'scoped memory for tpu_custom_call.1']
    #allocation9 [shape = 'u8[16384]{0}', space=vmem, size = 0x4000, scoped, tag = 'input window, operand 2']
    #allocation10 [shape = 'u8[65536]{0}', space=vmem, size = 0x10000, scoped, tag = 'input window, operand 3, single buffered']
    #allocation11 [shape = 's32[1]{0}', space=sflag, size = 0x4, scoped, tag = 'scoped memory for tpu_custom_call.1']
    #allocation12 [shape = 'u8[131072]{0}', space=vmem, size = 0x20000, scoped, tag = 'input window, operand 5, single buffered']
    #allocation13 [shape = 'u8[65536]{0}', space=vmem, size = 0x10000, scoped, tag = 'input window, operand 7, single buffered']
    #allocation14 [shape = 's32[1]{0}', space=sflag, size = 0x4, scoped, tag = 'scoped memory for tpu_custom_call.1']
    #allocation15 [shape = 'u8[16384]{0}', space=vmem, size = 0x4000, scoped, tag = 'output window, operand 0']
    %14 = vsyncpa [#allocation5], 0
    %s15 = scalar_lea.sflag [#allocation5], 1
    %16 = vsyncpa %s15, 0
    %17 = vsyncpa [#allocation8], 0
    %s18 = scalar_lea.sflag [#allocation8], 1
    %19 = vsyncpa %s18, 0
    %20 = vsyncpa [#allocation11], 0
    %21 = vsyncpa [#allocation14], 0
    %22 = vsyncpa [#allocation6], 0
    %s23 = scalar_lea.sflag [#allocation6], 1
    %24 = vsyncpa %s23, 0
    loop: start=0, step=1, limit=4
    $region2: #{tpu_custom_call.1} parent=1 // loop_pre_header
      _
    $region3: #{tpu_custom_call.1} parent=1 // loop_header
      %s26 = sphi 0, %s30
      %p27 = scmp.ge.s32.totalorder %s26, 4
      %s33 = sphi 0, %s45
      %s34 = sphi 0, %s41
      %s35 = sphi 0, %s33
      %s36 = sphi 0, %s34
      %s37 = sphi 0, %s35
      %s38 = sphi 0, %s36
      %s50 = sphi 0, %s52
      %s53 = sphi 0, %s50
      %s54 = sphi 0, %s53
      %s70 = sphi 0, %s54
      %s76 = sphi 0, %s78
      %s79 = sphi 0, %s76
      %s80 = sphi 0, %s79
      %s96 = sphi 0, %s80
      %s104 = sphi 0, %s106
      %s107 = sphi 0, %s104
      %s108 = sphi 0, %s107
      %s124 = sphi 0, %s108
      %s128 = sphi 0, %s128
      %s130 = sphi 0, %s128
      %s131 = sphi 0, %s130
      %s145 = sphi 0, %s131
      %s149 = sphi 0, %s149
      %s151 = sphi 0, %s149
      %s152 = sphi 0, %s151
      %s166 = sphi 0, %s152
      %s170 = sphi 0, %s170
      %s172 = sphi 0, %s170
      %s173 = sphi 0, %s172
      %s187 = sphi 0, %s173
      %s191 = sphi 0, %s191
      %s193 = sphi 0, %s191
      %s194 = sphi 0, %s193
      %s208 = sphi 0, %s194
      %s212 = sphi 0, %s212
      %s214 = sphi 0, %s212
      %s215 = sphi 0, %s214
      %s229 = sphi 0, %s215
      %s233 = sphi 0, %s233
      %s235 = sphi 0, %s233
      %s236 = sphi 0, %s235
      %s250 = sphi 0, %s236
      %s258 = sphi 0, %s260
      %s261 = sphi 0, %s258
      %s262 = sphi 0, %s261
      %s278 = sphi 0, %s262
    $region4: #{tpu_custom_call.1} parent=1 // loop_header_branch
      %29 = sbr.rel (%p27) target = $region8
    $region5: #{tpu_custom_call.1} parent=1 // loop_body
      %s31 = ssub.s32 %s26, 1
      %s32 = ssub.s32 %s26, 2
      %s39 = sadd.s32 1, %s34
      %p40 = scmp.ge.s32.totalorder %s39, 1
      %s41 = scalar_select %p40, 0, %s39
      %s42 = sadd.s32 1, %s33
      %s43 = scalar_select %p40, %s42, %s33
      %p44 = scmp.ge.s32.totalorder %s43, 2
      %s45 = scalar_select %p44, 0, %s43
      %s46 = ssub.s32 %s33, %s45
      %s47 = ssub.s32 %s34, %s41
      %s48 = sor.u32 %s46, %s47
      %p49 = scmp.eq.s32.totalorder %s48, 0
      %s51 = sadd.s32 %s50, 1
      %s52 = scalar_select %p49, %s50, %s51
      %p55 = pneg %p49
      %p56 = scmp.eq.s32.totalorder %s26, 1
      %p57 = por %p55, %p56
      %p58 = scmp.ne.s32.totalorder %s50, %s53
      %p59 = scmp.eq.s32.totalorder %s26, 0
      %p60 = por %p58, %p59
      %p61 = scmp.ne.s32.totalorder %s50, %s53
      %p62 = scmp.eq.s32.totalorder %s31, 1
      %p63 = por %p61, %p62
      %p64 = scmp.ne.s32.totalorder %s53, %s54
      %p65 = scmp.eq.s32.totalorder %s31, 0
      %p66 = por %p64, %p65
      %p67 = scmp.ne.s32.totalorder %s53, %s54
      %p68 = scmp.eq.s32.totalorder %s32, 1
      %p69 = por %p67, %p68
      %p71 = scmp.ne.s32.totalorder %s54, %s70
      %p72 = scmp.eq.s32.totalorder %s32, 0
      %p73 = por %p71, %p72
      %s74 = ssub.s32 %s33, %s45
      %p75 = scmp.eq.s32.totalorder %s74, 0
      %s77 = sadd.s32 %s76, 1
      %s78 = scalar_select %p75, %s76, %s77
      %p81 = pneg %p75
      %p82 = scmp.eq.s32.totalorder %s26, 1
      %p83 = por %p81, %p82
      %p84 = scmp.ne.s32.totalorder %s76, %s79
      %p85 = scmp.eq.s32.totalorder %s26, 0
      %p86 = por %p84, %p85
      %p87 = scmp.ne.s32.totalorder %s76, %s79
      %p88 = scmp.eq.s32.totalorder %s31, 1
      %p89 = por %p87, %p88
      %p90 = scmp.ne.s32.totalorder %s79, %s80
      %p91 = scmp.eq.s32.totalorder %s31, 0
      %p92 = por %p90, %p91
      %p93 = scmp.ne.s32.totalorder %s79, %s80
      %p94 = scmp.eq.s32.totalorder %s32, 1
      %p95 = por %p93, %p94
      %p97 = scmp.ne.s32.totalorder %s80, %s96
      %p98 = scmp.eq.s32.totalorder %s32, 0
      %p99 = por %p97, %p98
      %s100 = ssub.s32 %s33, %s45
      %s101 = ssub.s32 %s34, %s41
      %s102 = sor.u32 %s100, %s101
      %p103 = scmp.eq.s32.totalorder %s102, 0
      %s105 = sadd.s32 %s104, 1
      %s106 = scalar_select %p103, %s104, %s105
      %p109 = pneg %p103
      %p110 = scmp.eq.s32.totalorder %s26, 1
      %p111 = por %p109, %p110
      %p112 = scmp.ne.s32.totalorder %s104, %s107
      %p113 = scmp.eq.s32.totalorder %s26, 0
      %p114 = por %p112, %p113
      %p115 = scmp.ne.s32.totalorder %s104, %s107
      %p116 = scmp.eq.s32.totalorder %s31, 1
      %p117 = por %p115, %p116
      %p118 = scmp.ne.s32.totalorder %s107, %s108
      %p119 = scmp.eq.s32.totalorder %s31, 0
      %p120 = por %p118, %p119
      %p121 = scmp.ne.s32.totalorder %s107, %s108
      %p122 = scmp.eq.s32.totalorder %s32, 1
      %p123 = por %p121, %p122
      %p125 = scmp.ne.s32.totalorder %s108, %s124
      %p126 = scmp.eq.s32.totalorder %s32, 0
      %p127 = por %p125, %p126
      %s129 = sadd.s32 %s128, 1
      %p132 = scmp.eq.s32.totalorder %s26, 1
      %p133 = scmp.ne.s32.totalorder %s128, %s130
      %p134 = scmp.eq.s32.totalorder %s26, 0
      %p135 = por %p133, %p134
      %p136 = scmp.ne.s32.totalorder %s128, %s130
      %p137 = scmp.eq.s32.totalorder %s31, 1
      %p138 = por %p136, %p137
      %p139 = scmp.ne.s32.totalorder %s130, %s131
      %p140 = scmp.eq.s32.totalorder %s31, 0
      %p141 = por %p139, %p140
      %p142 = scmp.ne.s32.totalorder %s130, %s131
      %p143 = scmp.eq.s32.totalorder %s32, 1
      %p144 = por %p142, %p143
      %p146 = scmp.ne.s32.totalorder %s131, %s145
      %p147 = scmp.eq.s32.totalorder %s32, 0
      %p148 = por %p146, %p147
      %s150 = sadd.s32 %s149, 1
      %p153 = scmp.eq.s32.totalorder %s26, 1
      %p154 = scmp.ne.s32.totalorder %s149, %s151
      %p155 = scmp.eq.s32.totalorder %s26, 0
      %p156 = por %p154, %p155
      %p157 = scmp.ne.s32.totalorder %s149, %s151
      %p158 = scmp.eq.s32.totalorder %s31, 1
      %p159 = por %p157, %p158
      %p160 = scmp.ne.s32.totalorder %s151, %s152
      %p161 = scmp.eq.s32.totalorder %s31, 0
      %p162 = por %p160, %p161
      %p163 = scmp.ne.s32.totalorder %s151, %s152
      %p164 = scmp.eq.s32.totalorder %s32, 1
      %p165 = por %p163, %p164
      %p167 = scmp.ne.s32.totalorder %s152, %s166
      %p168 = scmp.eq.s32.totalorder %s32, 0
      %p169 = por %p167, %p168
      %s171 = sadd.s32 %s170, 1
      %p174 = scmp.eq.s32.totalorder %s26, 1
      %p175 = scmp.ne.s32.totalorder %s170, %s172
      %p176 = scmp.eq.s32.totalorder %s26, 0
      %p177 = por %p175, %p176
      %p178 = scmp.ne.s32.totalorder %s170, %s172
      %p179 = scmp.eq.s32.totalorder %s31, 1
      %p180 = por %p178, %p179
      %p181 = scmp.ne.s32.totalorder %s172, %s173
      %p182 = scmp.eq.s32.totalorder %s31, 0
      %p183 = por %p181, %p182
      %p184 = scmp.ne.s32.totalorder %s172, %s173
      %p185 = scmp.eq.s32.totalorder %s32, 1
      %p186 = por %p184, %p185
      %p188 = scmp.ne.s32.totalorder %s173, %s187
      %p189 = scmp.eq.s32.totalorder %s32, 0
      %p190 = por %p188, %p189
      %s192 = sadd.s32 %s191, 1
      %p195 = scmp.eq.s32.totalorder %s26, 1
      %p196 = scmp.ne.s32.totalorder %s191, %s193
      %p197 = scmp.eq.s32.totalorder %s26, 0
      %p198 = por %p196, %p197
      %p199 = scmp.ne.s32.totalorder %s191, %s193
      %p200 = scmp.eq.s32.totalorder %s31, 1
      %p201 = por %p199, %p200
      %p202 = scmp.ne.s32.totalorder %s193, %s194
      %p203 = scmp.eq.s32.totalorder %s31, 0
      %p204 = por %p202, %p203
      %p205 = scmp.ne.s32.totalorder %s193, %s194
      %p206 = scmp.eq.s32.totalorder %s32, 1
      %p207 = por %p205, %p206
      %p209 = scmp.ne.s32.totalorder %s194, %s208
      %p210 = scmp.eq.s32.totalorder %s32, 0
      %p211 = por %p209, %p210
      %s213 = sadd.s32 %s212, 1
      %p216 = scmp.eq.s32.totalorder %s26, 1
      %p217 = scmp.ne.s32.totalorder %s212, %s214
      %p218 = scmp.eq.s32.totalorder %s26, 0
      %p219 = por %p217, %p218
      %p220 = scmp.ne.s32.totalorder %s212, %s214
      %p221 = scmp.eq.s32.totalorder %s31, 1
      %p222 = por %p220, %p221
      %p223 = scmp.ne.s32.totalorder %s214, %s215
      %p224 = scmp.eq.s32.totalorder %s31, 0
      %p225 = por %p223, %p224
      %p226 = scmp.ne.s32.totalorder %s214, %s215
      %p227 = scmp.eq.s32.totalorder %s32, 1
      %p228 = por %p226, %p227
      %p230 = scmp.ne.s32.totalorder %s215, %s229
      %p231 = scmp.eq.s32.totalorder %s32, 0
      %p232 = por %p230, %p231
      %s234 = sadd.s32 %s233, 1
      %p237 = scmp.eq.s32.totalorder %s26, 1
      %p238 = scmp.ne.s32.totalorder %s233, %s235
      %p239 = scmp.eq.s32.totalorder %s26, 0
      %p240 = por %p238, %p239
      %p241 = scmp.ne.s32.totalorder %s233, %s235
      %p242 = scmp.eq.s32.totalorder %s31, 1
      %p243 = por %p241, %p242
      %p244 = scmp.ne.s32.totalorder %s235, %s236
      %p245 = scmp.eq.s32.totalorder %s31, 0
      %p246 = por %p244, %p245
      %p247 = scmp.ne.s32.totalorder %s235, %s236
      %p248 = scmp.eq.s32.totalorder %s32, 1
      %p249 = por %p247, %p248
      %p251 = scmp.ne.s32.totalorder %s236, %s250
      %p252 = scmp.eq.s32.totalorder %s32, 0
      %p253 = por %p251, %p252
      %s254 = ssub.s32 %s33, %s45
      %s255 = ssub.s32 %s34, %s41
      %s256 = sor.u32 %s254, %s255
      %p257 = scmp.eq.s32.totalorder %s256, 0
      %s259 = sadd.s32 %s258, 1
      %s260 = scalar_select %p257, %s258, %s259
      %p263 = pneg %p257
      %p264 = scmp.eq.s32.totalorder %s26, 1
      %p265 = por %p263, %p264
      %p266 = scmp.ne.s32.totalorder %s258, %s261
      %p267 = scmp.eq.s32.totalorder %s26, 0
      %p268 = por %p266, %p267
      %p269 = scmp.ne.s32.totalorder %s258, %s261
      %p270 = scmp.eq.s32.totalorder %s31, 1
      %p271 = por %p269, %p270
      %p272 = scmp.ne.s32.totalorder %s261, %s262
      %p273 = scmp.eq.s32.totalorder %s31, 0
      %p274 = por %p272, %p273
      %p275 = scmp.ne.s32.totalorder %s261, %s262
      %p276 = scmp.eq.s32.totalorder %s32, 1
      %p277 = por %p275, %p276
      %p279 = scmp.ne.s32.totalorder %s262, %s278
      %p280 = scmp.eq.s32.totalorder %s32, 0
      %p281 = por %p279, %p280
      %p282 = scmp.le.s32.totalorder 1, %s26
      %p283 = scmp.lt.s32.totalorder %s26, 3
      %p284 = pnand %p282, %p283
      %p285 = pneg %p284
      // Predicated region
      $region9: #{tpu_custom_call.1} parent=5 // pred_check
        _
      $region10: #{tpu_custom_call.1} parent=5 // pred_check_branch
        %287 = sbr.rel (%p284) target = $region12
      $region11: #{tpu_custom_call.1} parent=5 // pred_region
        %s288 = ssub.s32 %s26, 1
        // Predicated region
        $region13: #{tpu_custom_call.1} parent=11 // pred_check
          %p289 = pneg %p141
        $region14: #{tpu_custom_call.1} parent=11 // pred_check_branch
          %291 = sbr.rel (%p289) target = $region16
        $region15: #{tpu_custom_call.1} parent=11 // pred_region
          %s293 = ssub.s32 2048, 2048
          %294 = vsyncadd [#allocation11], %s293
          %s295 = sshll.u32 [#allocation10], 4
          %s296 = int_to_ptr.vmem [resolvable:$true] %s295
          %301 = dma.hbm_to_vmem [thread:$0]  %s3, 2048, %s296, [#allocation11], 128, 128, 8
        $region16: #{tpu_custom_call.1} parent=11 // pred_fallthru
          _
        // Predicated region
        $region17: #{tpu_custom_call.1} parent=11 // pred_check
          %p302 = pneg %p162
        $region18: #{tpu_custom_call.1} parent=11 // pred_check_branch
          %304 = sbr.rel (%p302) target = $region20
        $region19: #{tpu_custom_call.1} parent=11 // pred_region
          _
        $region20: #{tpu_custom_call.1} parent=11 // pred_fallthru
          _
        // Predicated region
        $region21: #{tpu_custom_call.1} parent=11 // pred_check
          %p305 = pneg %p183
        $region22: #{tpu_custom_call.1} parent=11 // pred_check_branch
          %307 = sbr.rel (%p305) target = $region24
        $region23: #{tpu_custom_call.1} parent=11 // pred_region
          %s309 = ssub.s32 4096, 4096
          %310 = vsyncadd [#allocation11], %s309
          %s311 = sshll.u32 [#allocation12], 4
          %s312 = int_to_ptr.vmem [resolvable:$true] %s311
          %317 = dma.hbm_to_vmem [thread:$0]  %s5, 4096, %s312, [#allocation11], 256, 256, 16
        $region24: #{tpu_custom_call.1} parent=11 // pred_fallthru
          _
        // Predicated region
        $region25: #{tpu_custom_call.1} parent=11 // pred_check
          %p318 = pneg %p204
        $region26: #{tpu_custom_call.1} parent=11 // pred_check_branch
          %320 = sbr.rel (%p318) target = $region28
        $region27: #{tpu_custom_call.1} parent=11 // pred_region
          _
        $region28: #{tpu_custom_call.1} parent=11 // pred_fallthru
          _
        // Predicated region
        $region29: #{tpu_custom_call.1} parent=11 // pred_check
          %p321 = pneg %p225
        $region30: #{tpu_custom_call.1} parent=11 // pred_check_branch
          %323 = sbr.rel (%p321) target = $region32
        $region31: #{tpu_custom_call.1} parent=11 // pred_region
          %s325 = ssub.s32 2048, 2048
          %326 = vsyncadd [#allocation14], %s325
          %s327 = sshll.u32 [#allocation13], 4
          %s328 = int_to_ptr.vmem [resolvable:$true] %s327
          %333 = dma.hbm_to_vmem [thread:$0]  %s7, 2048, %s328, [#allocation14], 128, 128, 8
        $region32: #{tpu_custom_call.1} parent=11 // pred_fallthru
          _
        // Predicated region
        $region33: #{tpu_custom_call.1} parent=11 // pred_check
          %p334 = pneg %p246
        $region34: #{tpu_custom_call.1} parent=11 // pred_check_branch
          %336 = sbr.rel (%p334) target = $region36
        $region35: #{tpu_custom_call.1} parent=11 // pred_region
          _
        $region36: #{tpu_custom_call.1} parent=11 // pred_fallthru
          _
      $region12: #{tpu_custom_call.1} parent=5 // pred_fallthru
        _
      %p337 = scmp.lt.s32.totalorder %s26, 2
      // Predicated region
      $region37: #{tpu_custom_call.1} parent=5 // pred_check
        %p338 = pneg %p337
      $region38: #{tpu_custom_call.1} parent=5 // pred_check_branch
        %340 = sbr.rel (%p338) target = $region40
      $region39: #{tpu_custom_call.1} parent=5 // pred_region
        // Predicated region
        $region41: #{tpu_custom_call.1} parent=39 // pred_check
          %p341 = pneg %p60
        $region42: #{tpu_custom_call.1} parent=39 // pred_check_branch
          %343 = sbr.rel (%p341) target = $region44
        $region43: #{tpu_custom_call.1} parent=39 // pred_region
          %s344 = sand.u32 %s50, 1
          %s345 = scalar_lea.sflag [#allocation5], %s344
          %s346 = sand.u32 %s50, 1
          %s347 = smul.addr %s346, 16
          %s348 = scalar_lea.vmem [#allocation4], %s347
          %s349 = smul.u32 2, %s34
          %s351 = ssub.s32 256, 256
          %352 = vsyncadd %s345, %s351
          %s353 = smul.addr %s33, 2
          %s354 = sadd.s32 %s349, %s353
          %s355 = smul.addr %s354, 128
          %s356 = scalar_lea.hbm %s0, %s355
          %s357 = sshll.u32 %s348, 4
          %s358 = int_to_ptr.vmem [resolvable:$true] %s357
          %363 = dma.hbm_to_vmem [thread:$0]  %s356, 256, %s358, %s345, 128, 128, 8
        $region44: #{tpu_custom_call.1} parent=39 // pred_fallthru
          _
        // Predicated region
        $region45: #{tpu_custom_call.1} parent=39 // pred_check
          %p364 = pneg %p86
        $region46: #{tpu_custom_call.1} parent=39 // pred_check_branch
          %366 = sbr.rel (%p364) target = $region48
        $region47: #{tpu_custom_call.1} parent=39 // pred_region
          %s367 = sand.u32 %s26, 1
          %s368 = scalar_lea.sflag [#allocation8], %s367
          %s369 = sand.u32 %s76, 1
          %s370 = smul.addr %s369, 16
          %s371 = scalar_lea.vmem [#allocation7], %s370
          %s373 = ssub.s32 256, 256
          %374 = vsyncadd %s368, %s373
          %s375 = smul.addr %s33, 2
          %s376 = smul.addr %s375, 128
          %s377 = scalar_lea.hbm %s1, %s376
          %s378 = sshll.u32 %s371, 4
          %s379 = int_to_ptr.vmem [resolvable:$true] %s378
          %384 = dma.hbm_to_vmem [thread:$0]  %s377, 256, %s379, %s368, 128, 128, 8
        $region48: #{tpu_custom_call.1} parent=39 // pred_fallthru
          _
        // Predicated region
        $region49: #{tpu_custom_call.1} parent=39 // pred_check
          %p385 = pneg %p114
        $region50: #{tpu_custom_call.1} parent=39 // pred_check_branch
          %387 = sbr.rel (%p385) target = $region52
        $region51: #{tpu_custom_call.1} parent=39 // pred_region
          %s388 = sand.u32 %s26, 1
          %s389 = scalar_lea.sflag [#allocation8], %s388
          %s390 = sand.u32 %s104, 1
          %s391 = smul.addr %s390, 16
          %s392 = scalar_lea.vmem [#allocation9], %s391
          %s393 = smul.u32 2, %s34
          %s395 = ssub.s32 256, 256
          %396 = vsyncadd %s389, %s395
          %s397 = smul.addr %s33, 2
          %s398 = sadd.s32 %s393, %s397
          %s399 = smul.addr %s398, 128
          %s400 = scalar_lea.hbm %s2, %s399
          %s401 = sshll.u32 %s392, 4
          %s402 = int_to_ptr.vmem [resolvable:$true] %s401
          %407 = dma.hbm_to_vmem [thread:$0]  %s400, 256, %s402, %s389, 128, 128, 8
        $region52: #{tpu_custom_call.1} parent=39 // pred_fallthru
          _
      $region40: #{tpu_custom_call.1} parent=5 // pred_fallthru
        _
      %p408 = scmp.le.s32.totalorder 1, %s26
      %p409 = scmp.lt.s32.totalorder %s26, 3
      %p410 = pnand %p408, %p409
      %p411 = pneg %p410
      // Predicated region
      $region53: #{tpu_custom_call.1} parent=5 // pred_check
        _
      $region54: #{tpu_custom_call.1} parent=5 // pred_check_branch
        %413 = sbr.rel (%p410) target = $region56
      $region55: #{tpu_custom_call.1} parent=5 // pred_region
        %s414 = ssub.s32 %s26, 1
        %s415 = sand.u32 %s53, 1
        %s416 = scalar_lea.sflag [#allocation5], %s415
        %s417 = sand.u32 %s53, 1
        %s418 = smul.addr %s417, 16
        %s419 = scalar_lea.vmem [#allocation4], %s418
        // Predicated region
        $region57: #{tpu_custom_call.1} parent=55 // pred_check
          %p420 = pneg %p66
        $region58: #{tpu_custom_call.1} parent=55 // pred_check_branch
          %422 = sbr.rel (%p420) target = $region60
        $region59: #{tpu_custom_call.1} parent=55 // pred_region
          %423 = dma.done %s416, 256
        $region60: #{tpu_custom_call.1} parent=55 // pred_fallthru
          _
        %s424 = sand.u32 %s31, 1
        %s425 = scalar_lea.sflag [#allocation8], %s424
        %s426 = sand.u32 %s79, 1
        %s427 = smul.addr %s426, 16
        %s428 = scalar_lea.vmem [#allocation7], %s427
        // Predicated region
        $region61: #{tpu_custom_call.1} parent=55 // pred_check
          %p429 = pneg %p92
        $region62: #{tpu_custom_call.1} parent=55 // pred_check_branch
          %431 = sbr.rel (%p429) target = $region64
        $region63: #{tpu_custom_call.1} parent=55 // pred_region
          %432 = dma.done %s425, 256
        $region64: #{tpu_custom_call.1} parent=55 // pred_fallthru
          _
        %s433 = sand.u32 %s31, 1
        %s434 = scalar_lea.sflag [#allocation8], %s433
        %s435 = sand.u32 %s107, 1
        %s436 = smul.addr %s435, 16
        %s437 = scalar_lea.vmem [#allocation9], %s436
        // Predicated region
        $region65: #{tpu_custom_call.1} parent=55 // pred_check
          %p438 = pneg %p120
        $region66: #{tpu_custom_call.1} parent=55 // pred_check_branch
          %440 = sbr.rel (%p438) target = $region68
        $region67: #{tpu_custom_call.1} parent=55 // pred_region
          %441 = dma.done %s434, 256
        $region68: #{tpu_custom_call.1} parent=55 // pred_fallthru
          _
        // Predicated region
        $region69: #{tpu_custom_call.1} parent=55 // pred_check
          %p442 = pneg %p141
        $region70: #{tpu_custom_call.1} parent=55 // pred_check_branch
          %444 = sbr.rel (%p442) target = $region72
        $region71: #{tpu_custom_call.1} parent=55 // pred_region
          %445 = dma.done [#allocation11], 2048
        $region72: #{tpu_custom_call.1} parent=55 // pred_fallthru
          _
        // Predicated region
        $region73: #{tpu_custom_call.1} parent=55 // pred_check
          %p446 = pneg %p183
        $region74: #{tpu_custom_call.1} parent=55 // pred_check_branch
          %448 = sbr.rel (%p446) target = $region76
        $region75: #{tpu_custom_call.1} parent=55 // pred_region
          %449 = dma.done [#allocation11], 4096
        $region76: #{tpu_custom_call.1} parent=55 // pred_fallthru
          _
        // Predicated region
        $region77: #{tpu_custom_call.1} parent=55 // pred_check
          %p450 = pneg %p225
        $region78: #{tpu_custom_call.1} parent=55 // pred_check_branch
          %452 = sbr.rel (%p450) target = $region80
        $region79: #{tpu_custom_call.1} parent=55 // pred_region
          %453 = dma.done [#allocation14], 2048
        $region80: #{tpu_custom_call.1} parent=55 // pred_fallthru
          _
        %s454 = sand.u32 %s53, 1
        %s455 = scalar_lea.sflag [#allocation5], %s454
        %s456 = sand.u32 %s53, 1
        %s457 = smul.addr %s456, 16
        %s458 = scalar_lea.vmem [#allocation4], %s457
        %p459 = pneg %p66
        %p460 = pneg %p63
        %s461 = sand.u32 %s31, 1
        %s462 = scalar_lea.sflag [#allocation8], %s461
        %s463 = sand.u32 %s79, 1
        %s464 = smul.addr %s463, 16
        %s465 = scalar_lea.vmem [#allocation7], %s464
        %p466 = pneg %p92
        %p467 = pneg %p89
        %s468 = sand.u32 %s31, 1
        %s469 = scalar_lea.sflag [#allocation8], %s468
        %s470 = sand.u32 %s107, 1
        %s471 = smul.addr %s470, 16
        %s472 = scalar_lea.vmem [#allocation9], %s471
        %p473 = pneg %p120
        %p474 = pneg %p117
        %p475 = pneg %p141
        %p476 = pneg %p138
        %p477 = pneg %p162
        %p478 = pneg %p159
        %p479 = pneg %p183
        %p480 = pneg %p180
        %p481 = pneg %p204
        %p482 = pneg %p201
        %p483 = pneg %p225
        %p484 = pneg %p222
        %p485 = pneg %p246
        %p486 = pneg %p243
        %p487 = pneg %p274
        %p488 = pneg %p271
        %s489 = sand.u32 %s261, 1
        %s490 = scalar_lea.sflag [#allocation6], %s489
        %s491 = sand.u32 %s261, 1
        %s492 = smul.addr %s491, 16
        %s493 = scalar_lea.vmem [#allocation15], %s492
        %s494 = smul.u32 2, %s36
        %s495 = smul.u32 2, %s36
        %s496 = smul.u32 2, %s36
        %p497 = scmp.eq.s32.totalorder %s36, 0
        // Predicated region
        $region81: #{tpu_custom_call.1} parent=55 // pred_check
          %p498 = pneg %p497
        $region82: #{tpu_custom_call.1} parent=55 // pred_check_branch
          %500 = sbr.rel (%p498) target = $region84
        $region83: #{tpu_custom_call.1} parent=55 // pred_region
          %v501 = vld [vmem:[%s428] sm:$0xff]
          %v502 = vld [vmem:[%s428 + $0x8] sm:$0xff]
          %v503 = vld [vmem:[#allocation12] sm:$0xff]
          %v504 = vld [vmem:[#allocation12 + $0x8] sm:$0xff]
          %v505 = vld [vmem:[#allocation12 + $0x10] sm:$0xff]
          %v506 = vld [vmem:[#allocation12 + $0x18] sm:$0xff]
          %v507 = vld [vmem:[#allocation12 + $0x20] sm:$0xff]
          %v508 = vld [vmem:[#allocation12 + $0x28] sm:$0xff]
          %v509 = vld [vmem:[#allocation12 + $0x30] sm:$0xff]
          %v510 = vld [vmem:[#allocation12 + $0x38] sm:$0xff]
          %v511 = vld [vmem:[#allocation12 + $0x40] sm:$0xff]
          %v512 = vld [vmem:[#allocation12 + $0x48] sm:$0xff]
          %v513 = vld [vmem:[#allocation12 + $0x50] sm:$0xff]
          %v514 = vld [vmem:[#allocation12 + $0x58] sm:$0xff]
          %v515 = vld [vmem:[#allocation12 + $0x60] sm:$0xff]
          %v516 = vld [vmem:[#allocation12 + $0x68] sm:$0xff]
          %v517 = vld [vmem:[#allocation12 + $0x70] sm:$0xff]
          %v518 = vld [vmem:[#allocation12 + $0x78] sm:$0xff]
          %v519 = vld [vmem:[#allocation12 + $0x80] sm:$0xff]
          %v520 = vld [vmem:[#allocation12 + $0x88] sm:$0xff]
          %v521 = vld [vmem:[#allocation12 + $0x90] sm:$0xff]
          %v522 = vld [vmem:[#allocation12 + $0x98] sm:$0xff]
          %v523 = vld [vmem:[#allocation12 + $0xa0] sm:$0xff]
          %v524 = vld [vmem:[#allocation12 + $0xa8] sm:$0xff]
          %v525 = vld [vmem:[#allocation12 + $0xb0] sm:$0xff]
          %v526 = vld [vmem:[#allocation12 + $0xb8] sm:$0xff]
          %v527 = vld [vmem:[#allocation12 + $0xc0] sm:$0xff]
          %v528 = vld [vmem:[#allocation12 + $0xc8] sm:$0xff]
          %v529 = vld [vmem:[#allocation12 + $0xd0] sm:$0xff]
          %v530 = vld [vmem:[#allocation12 + $0xd8] sm:$0xff]
          %v531 = vld [vmem:[#allocation12 + $0xe0] sm:$0xff]
          %v532 = vld [vmem:[#allocation12 + $0xe8] sm:$0xff]
          %v533 = vld [vmem:[#allocation12 + $0xf0] sm:$0xff]
          %v534 = vld [vmem:[#allocation12 + $0xf8] sm:$0xff]
          %v535 = vld [vmem:[%s6] sm:$0x3]
          %v537 = vlaneseq
          %v538 = vshrl.u32 %v537, 7
          %v539 = vsub.s32 0, %v538
          %v540 = vrot.slane %v535, %v539
          %v541 = vlaneseq
          %v542 = vshrl.u32 %v541, 7
          %v543 = vsub.s32 1, %v542
          %v544 = vrot.slane %v535, %v543
          %547 = vmatprep.subr.mxu0 %v534
          %548 = vmatpush1.msra.mxu0 %v533
          %549 = vmatprep.subr.mxu0 %v532
          %550 = vmatpush1.msra.mxu0 %v531
          %551 = vmatprep.subr.mxu0 %v530
          %552 = vmatpush1.msra.mxu0 %v529
          %553 = vmatprep.subr.mxu0 %v528
          %554 = vmatpush1.msra.mxu0 %v527
          %555 = vmatprep.subr.mxu0 %v526
          %556 = vmatpush1.msra.mxu0 %v525
          %557 = vmatprep.subr.mxu0 %v524
          %558 = vmatpush1.msra.mxu0 %v523
          %559 = vmatprep.subr.mxu0 %v522
          %560 = vmatpush1.msra.mxu0 %v521
          %561 = vmatprep.subr.mxu0 %v520
          %562 = vmatpush1.msra.mxu0 %v519
          %563 = vmatprep.subr.mxu0 %v518
          %564 = vmatpush1.msra.mxu0 %v517
          %565 = vmatprep.subr.mxu0 %v516
          %566 = vmatpush1.msra.mxu0 %v515
          %567 = vmatprep.subr.mxu0 %v514
          %568 = vmatpush1.msra.mxu0 %v513
          %569 = vmatprep.subr.mxu0 %v512
          %570 = vmatpush1.msra.mxu0 %v511
          %571 = vmatprep.subr.mxu0 %v510
          %572 = vmatpush1.msra.mxu0 %v509
          %573 = vmatprep.subr.mxu0 %v508
          %574 = vmatpush1.msra.mxu0 %v507
          %575 = vmatprep.subr.mxu0 %v506
          %576 = vmatpush1.msra.mxu0 %v505
          %577 = vmatprep.subr.mxu0 %v504
          %578 = vmatpush1.msra.mxu0 %v503
          %579 = vmatprep.subr.mxu0 0.0
          %580 = vmatpush2.msra.mxu0 0.0
          %581 = vmatprep.subr.mxu0 0.0
          %582 = vmatpush2.msra.mxu0 0.0
          %583 = vmatprep.subr.mxu0 0.0
          %584 = vmatpush2.msra.mxu0 0.0
          %585 = vmatprep.subr.mxu0 0.0
          %586 = vmatpush2.msra.mxu0 0.0
          %587 = vmatprep.subr.mxu0 0.0
          %588 = vmatpush2.msra.mxu0 0.0
          %589 = vmatprep.subr.mxu0 0.0
          %590 = vmatpush2.msra.mxu0 0.0
          %591 = vmatprep.subr.mxu0 0.0
          %592 = vmatpush2.msra.mxu0 0.0
          %593 = vmatprep.subr.mxu0 0.0
          %594 = vmatpush2.msra.mxu0 0.0
          %595 = vmatprep.subr.mxu0 0.0
          %596 = vmatpush2.msra.mxu0 0.0
          %597 = vmatprep.subr.mxu0 0.0
          %598 = vmatpush2.msra.mxu0 0.0
          %599 = vmatprep.subr.mxu0 0.0
          %600 = vmatpush2.msra.mxu0 0.0
          %601 = vmatprep.subr.mxu0 0.0
          %602 = vmatpush2.msra.mxu0 0.0
          %603 = vmatprep.subr.mxu0 0.0
          %604 = vmatpush2.msra.mxu0 0.0
          %605 = vmatprep.subr.mxu0 0.0
          %606 = vmatpush2.msra.mxu0 0.0
          %607 = vmatprep.subr.mxu0 0.0
          %608 = vmatpush2.msra.mxu0 0.0
          %609 = vmatprep.subr.mxu0 0.0
          %610 = vmatpush2.msra.mxu0 0.0
          %611 = vmatprep.mubr.f32.mxu0 0.0
          %612 = vmatmul.mubr.f32.gmra.mxu0 %v501
          %v613 = vpop.f32.mrf.mxu0
          %v614 = vadd.f32 %v540, %v613
          %v615 = vpop.f32.mrf.mxu0
          %v616 = vadd.f32 %v544, %v615
          %617 = vmatprep.mubr.f32.mxu0 0.0
          %618 = vmatmul.mubr.f32.gmra.mxu0 %v502
          %v619 = vpop.f32.mrf.mxu0
          %v620 = vadd.f32 %v540, %v619
          %v621 = vpop.f32.mrf.mxu0
          %v622 = vadd.f32 %v544, %v621
          %623 = vdwg.mxu0
          %vm624 = vcmask 261120
          %625 = vst.msk [vmem:[#allocation2] sm:$0xff] %vm624, %v614
          %626 = vst.msk [vmem:[#allocation2 + $0x8] sm:$0xff] %vm624, %v620
          %627 = vst.msk [vmem:[#allocation3] sm:$0xff] %vm624, %v616
          %628 = vst.msk [vmem:[#allocation3 + $0x8] sm:$0xff] %vm624, %v622
          %631 = vrot.lane.b32.xlu0 %v614, 96
          %v632 = vpop.permute.xlu0 %631
          %633 = vrot.lane.b32.xlu0 %v620, 96
          %v634 = vpop.permute.xlu0 %633
          %s637 = scalar_lea.vmem [#allocation2], 16
          %638 = vst.msk [vmem:[%s637] sm:$0xff] %vm624, %v632
          %639 = vst.msk [vmem:[%s637 + $0x8] sm:$0xff] %vm624, %v634
          %642 = vrot.lane.b32.xlu0 %v616, 96
          %v643 = vpop.permute.xlu0 %642
          %644 = vrot.lane.b32.xlu0 %v622, 96
          %v645 = vpop.permute.xlu0 %644
          %s648 = scalar_lea.vmem [#allocation3], 16
          %649 = vst.msk [vmem:[%s648] sm:$0xff] %vm624, %v643
          %650 = vst.msk [vmem:[%s648 + $0x8] sm:$0xff] %vm624, %v645
          %651 = vrot.lane.b32.xlu0 %v614, 64
          %v652 = vpop.permute.xlu0 %651
          %653 = vrot.lane.b32.xlu0 %v620, 64
          %v654 = vpop.permute.xlu0 %653
          %s657 = scalar_lea.vmem [#allocation2], 32
          %658 = vst.msk [vmem:[%s657] sm:$0xff] %vm624, %v652
          %659 = vst.msk [vmem:[%s657 + $0x8] sm:$0xff] %vm624, %v654
          %660 = vrot.lane.b32.xlu0 %v616, 64
          %v661 = vpop.permute.xlu0 %660
          %662 = vrot.lane.b32.xlu0 %v622, 64
          %v663 = vpop.permute.xlu0 %662
          %s666 = scalar_lea.vmem [#allocation3], 32
          %667 = vst.msk [vmem:[%s666] sm:$0xff] %vm624, %v661
          %668 = vst.msk [vmem:[%s666 + $0x8] sm:$0xff] %vm624, %v663
          %669 = vrot.lane.b32.xlu0 %v614, 32
          %v670 = vpop.permute.xlu0 %669
          %671 = vrot.lane.b32.xlu0 %v620, 32
          %v672 = vpop.permute.xlu0 %671
          %s675 = scalar_lea.vmem [#allocation2], 48
          %676 = vst.msk [vmem:[%s675] sm:$0xff] %vm624, %v670
          %677 = vst.msk [vmem:[%s675 + $0x8] sm:$0xff] %vm624, %v672
          %678 = vrot.lane.b32.xlu0 %v616, 32
          %v679 = vpop.permute.xlu0 %678
          %680 = vrot.lane.b32.xlu0 %v622, 32
          %v681 = vpop.permute.xlu0 %680
          %s684 = scalar_lea.vmem [#allocation3], 48
          %685 = vst.msk [vmem:[%s684] sm:$0xff] %vm624, %v679
          %686 = vst.msk [vmem:[%s684 + $0x8] sm:$0xff] %vm624, %v681
        $region84: #{tpu_custom_call.1} parent=55 // pred_fallthru
          _
        %v687 = vld [vmem:[%s419] sm:$0xff]
        %v688 = vld [vmem:[%s419 + $0x8] sm:$0xff]
        %v689 = vld [vmem:[#allocation10] sm:$0xff]
        %v690 = vld [vmem:[#allocation10 + $0x8] sm:$0xff]
        %v691 = vld [vmem:[#allocation10 + $0x10] sm:$0xff]
        %v692 = vld [vmem:[#allocation10 + $0x18] sm:$0xff]
        %v693 = vld [vmem:[#allocation10 + $0x20] sm:$0xff]
        %v694 = vld [vmem:[#allocation10 + $0x28] sm:$0xff]
        %v695 = vld [vmem:[#allocation10 + $0x30] sm:$0xff]
        %v696 = vld [vmem:[#allocation10 + $0x38] sm:$0xff]
        %v697 = vld [vmem:[#allocation10 + $0x40] sm:$0xff]
        %v698 = vld [vmem:[#allocation10 + $0x48] sm:$0xff]
        %v699 = vld [vmem:[#allocation10 + $0x50] sm:$0xff]
        %v700 = vld [vmem:[#allocation10 + $0x58] sm:$0xff]
        %v701 = vld [vmem:[#allocation10 + $0x60] sm:$0xff]
        %v702 = vld [vmem:[#allocation10 + $0x68] sm:$0xff]
        %v703 = vld [vmem:[#allocation10 + $0x70] sm:$0xff]
        %v704 = vld [vmem:[#allocation10 + $0x78] sm:$0xff]
        %v705 = vld [vmem:[%s4] sm:$0x1]
        %v707 = vlaneseq
        %v708 = vshrl.u32 %v707, 7
        %v709 = vsub.s32 0, %v708
        %v710 = vrot.slane %v705, %v709
        %712 = vmatprep.subr.mxu0 0.0
        %713 = vmatpush1.msra.mxu0 %v704
        %714 = vmatprep.subr.mxu0 0.0
        %715 = vmatpush1.msra.mxu0 %v703
        %716 = vmatprep.subr.mxu0 0.0
        %717 = vmatpush1.msra.mxu0 %v702
        %718 = vmatprep.subr.mxu0 0.0
        %719 = vmatpush1.msra.mxu0 %v701
        %720 = vmatprep.subr.mxu0 0.0
        %721 = vmatpush1.msra.mxu0 %v700
        %722 = vmatprep.subr.mxu0 0.0
        %723 = vmatpush1.msra.mxu0 %v699
        %724 = vmatprep.subr.mxu0 0.0
        %725 = vmatpush1.msra.mxu0 %v698
        %726 = vmatprep.subr.mxu0 0.0
        %727 = vmatpush1.msra.mxu0 %v697
        %728 = vmatprep.subr.mxu0 0.0
        %729 = vmatpush1.msra.mxu0 %v696
        %730 = vmatprep.subr.mxu0 0.0
        %731 = vmatpush1.msra.mxu0 %v695
        %732 = vmatprep.subr.mxu0 0.0
        %733 = vmatpush1.msra.mxu0 %v694
        %734 = vmatprep.subr.mxu0 0.0
        %735 = vmatpush1.msra.mxu0 %v693
        %736 = vmatprep.subr.mxu0 0.0
        %737 = vmatpush1.msra.mxu0 %v692
        %738 = vmatprep.subr.mxu0 0.0
        %739 = vmatpush1.msra.mxu0 %v691
        %740 = vmatprep.subr.mxu0 0.0
        %741 = vmatpush1.msra.mxu0 %v690
        %742 = vmatprep.subr.mxu0 0.0
        %743 = vmatpush1.msra.mxu0 %v689
        %744 = vmatprep.subr.mxu0 0.0
        %745 = vmatpush2.msra.mxu0 0.0
        %746 = vmatprep.subr.mxu0 0.0
        %747 = vmatpush2.msra.mxu0 0.0
        %748 = vmatprep.subr.mxu0 0.0
        %749 = vmatpush2.msra.mxu0 0.0
        %750 = vmatprep.subr.mxu0 0.0
        %751 = vmatpush2.msra.mxu0 0.0
        %752 = vmatprep.subr.mxu0 0.0
        %753 = vmatpush2.msra.mxu0 0.0
        %754 = vmatprep.subr.mxu0 0.0
        %755 = vmatpush2.msra.mxu0 0.0
        %756 = vmatprep.subr.mxu0 0.0
        %757 = vmatpush2.msra.mxu0 0.0
        %758 = vmatprep.subr.mxu0 0.0
        %759 = vmatpush2.msra.mxu0 0.0
        %760 = vmatprep.subr.mxu0 0.0
        %761 = vmatpush2.msra.mxu0 0.0
        %762 = vmatprep.subr.mxu0 0.0
        %763 = vmatpush2.msra.mxu0 0.0
        %764 = vmatprep.subr.mxu0 0.0
        %765 = vmatpush2.msra.mxu0 0.0
        %766 = vmatprep.subr.mxu0 0.0
        %767 = vmatpush2.msra.mxu0 0.0
        %768 = vmatprep.subr.mxu0 0.0
        %769 = vmatpush2.msra.mxu0 0.0
        %770 = vmatprep.subr.mxu0 0.0
        %771 = vmatpush2.msra.mxu0 0.0
        %772 = vmatprep.subr.mxu0 0.0
        %773 = vmatpush2.msra.mxu0 0.0
        %774 = vmatprep.subr.mxu0 0.0
        %775 = vmatpush2.msra.mxu0 0.0
        %776 = vmatprep.mubr.f32.mxu0 0.0
        %777 = vmatmul.mubr.f32.gmra.mxu0 %v687
        %v778 = vpop.f32.mrf.mxu0
        %v779 = vadd.f32 %v710, %v778
        %v780 = vpop.f32.mrf.mxu0
        %781 = vmatprep.mubr.f32.mxu0 0.0
        %782 = vmatmul.mubr.f32.gmra.mxu0 %v688
        %v783 = vpop.f32.mrf.mxu0
        %v784 = vadd.f32 %v710, %v783
        %v785 = vpop.f32.mrf.mxu0
        %786 = vdwg.mxu0
        %v787 = vmul.f32 %v779, 0.17677669
        %v788 = vmul.f32 %v784, 0.17677669
        %791 = vrot.lane.b32.xlu0 %v787, 96
        %v792 = vpop.permute.xlu0 %791
        %793 = vrot.lane.b32.xlu0 %v788, 96
        %v794 = vpop.permute.xlu0 %793
        %795 = vrot.lane.b32.xlu0 %v787, 64
        %v796 = vpop.permute.xlu0 %795
        %797 = vrot.lane.b32.xlu0 %v788, 64
        %v798 = vpop.permute.xlu0 %797
        %799 = vrot.lane.b32.xlu0 %v787, 32
        %v800 = vpop.permute.xlu0 %799
        %801 = vrot.lane.b32.xlu0 %v788, 32
        %v802 = vpop.permute.xlu0 %801
        %v803 = vld [vmem:[#allocation2] sm:$0xff]
        %v804 = vld [vmem:[#allocation2 + $0x8] sm:$0xff]
        %v805 = vld [vmem:[#allocation2 + $0x10] sm:$0xff]
        %v806 = vld [vmem:[#allocation2 + $0x18] sm:$0xff]
        %v807 = vld [vmem:[#allocation2 + $0x20] sm:$0xff]
        %v808 = vld [vmem:[#allocation2 + $0x28] sm:$0xff]
        %v809 = vld [vmem:[#allocation2 + $0x30] sm:$0xff]
        %v810 = vld [vmem:[#allocation2 + $0x38] sm:$0xff]
        %v811 = vld [vmem:[#allocation3] sm:$0xff]
        %v812 = vld [vmem:[#allocation3 + $0x8] sm:$0xff]
        %v813 = vld [vmem:[#allocation3 + $0x10] sm:$0xff]
        %v814 = vld [vmem:[#allocation3 + $0x18] sm:$0xff]
        %v815 = vld [vmem:[#allocation3 + $0x20] sm:$0xff]
        %v816 = vld [vmem:[#allocation3 + $0x28] sm:$0xff]
        %v817 = vld [vmem:[#allocation3 + $0x30] sm:$0xff]
        %v818 = vld [vmem:[#allocation3 + $0x38] sm:$0xff]
        %vm819 = vcmask 261120
        %v820 = vsel %vm819, %v787, 0
        %v822 = vsel %vm819, %v788, 0
        %v825 = vsel %vm819, %v803, 0
        %v828 = vsel %vm819, %v804, 0
        %830 = vmatprep.subr.mxu0 0.0
        %831 = vmatpush1.xpose.msra.mxu0 0.0
        %832 = vmatprep.subr.mxu0 0.0
        %833 = vmatpush1.xpose.msra.mxu0 0.0
        %834 = vmatprep.subr.mxu0 0.0
        %835 = vmatpush1.xpose.msra.mxu0 0.0
        %836 = vmatprep.subr.mxu0 0.0
        %837 = vmatpush1.xpose.msra.mxu0 0.0
        %838 = vmatprep.subr.mxu0 0.0
        %839 = vmatpush1.xpose.msra.mxu0 0.0
        %840 = vmatprep.subr.mxu0 0.0
        %841 = vmatpush1.xpose.msra.mxu0 0.0
        %842 = vmatprep.subr.mxu0 0.0
        %843 = vmatpush1.xpose.msra.mxu0 0.0
        %844 = vmatprep.subr.mxu0 0.0
        %845 = vmatpush1.xpose.msra.mxu0 0.0
        %846 = vmatprep.subr.mxu0 0.0
        %847 = vmatpush1.xpose.msra.mxu0 0.0
        %848 = vmatprep.subr.mxu0 0.0
        %849 = vmatpush1.xpose.msra.mxu0 0.0
        %850 = vmatprep.subr.mxu0 0.0
        %851 = vmatpush1.xpose.msra.mxu0 0.0
        %852 = vmatprep.subr.mxu0 0.0
        %853 = vmatpush1.xpose.msra.mxu0 0.0
        %854 = vmatprep.subr.mxu0 0.0
        %855 = vmatpush1.xpose.msra.mxu0 0.0
        %856 = vmatprep.subr.mxu0 0.0
        %857 = vmatpush1.xpose.msra.mxu0 0.0
        %858 = vmatprep.subr.mxu0 0.0
        %859 = vmatpush1.xpose.msra.mxu0 %v828
        %860 = vmatprep.subr.mxu0 0.0
        %861 = vmatpush1.xpose.msra.mxu0 %v825
        %862 = vmatprep.subr.mxu0 0.0
        %863 = vmatpush2.xpose.msra.mxu0 0.0
        %864 = vmatprep.subr.mxu0 0.0
        %865 = vmatpush2.xpose.msra.mxu0 0.0
        %866 = vmatprep.subr.mxu0 0.0
        %867 = vmatpush2.xpose.msra.mxu0 0.0
        %868 = vmatprep.subr.mxu0 0.0
        %869 = vmatpush2.xpose.msra.mxu0 0.0
        %870 = vmatprep.subr.mxu0 0.0
        %871 = vmatpush2.xpose.msra.mxu0 0.0
        %872 = vmatprep.subr.mxu0 0.0
        %873 = vmatpush2.xpose.msra.mxu0 0.0
        %874 = vmatprep.subr.mxu0 0.0
        %875 = vmatpush2.xpose.msra.mxu0 0.0
        %876 = vmatprep.subr.mxu0 0.0
        %877 = vmatpush2.xpose.msra.mxu0 0.0
        %878 = vmatprep.subr.mxu0 0.0
        %879 = vmatpush2.xpose.msra.mxu0 0.0
        %880 = vmatprep.subr.mxu0 0.0
        %881 = vmatpush2.xpose.msra.mxu0 0.0
        %882 = vmatprep.subr.mxu0 0.0
        %883 = vmatpush2.xpose.msra.mxu0 0.0
        %884 = vmatprep.subr.mxu0 0.0
        %885 = vmatpush2.xpose.msra.mxu0 0.0
        %886 = vmatprep.subr.mxu0 0.0
        %887 = vmatpush2.xpose.msra.mxu0 0.0
        %888 = vmatprep.subr.mxu0 0.0
        %889 = vmatpush2.xpose.msra.mxu0 0.0
        %890 = vmatprep.subr.mxu0 0.0
        %891 = vmatpush2.xpose.msra.mxu0 0.0
        %892 = vmatprep.subr.mxu0 0.0
        %893 = vmatpush2.xpose.msra.mxu0 0.0
        %894 = vmatprep.mubr.f32.mxu0 0.0
        %895 = vmatmul.mubr.f32.gmra.mxu0 %v820
        %v896 = vpop.f32.mrf.mxu0
        %v897 = vadd.f32 0.0, %v896
        %v898 = vpop.f32.mrf.mxu0
        %899 = vmatprep.mubr.f32.mxu0 0.0
        %900 = vmatmul.mubr.f32.gmra.mxu0 %v822
        %v901 = vpop.f32.mrf.mxu0
        %v902 = vadd.f32 0.0, %v901
        %v903 = vpop.f32.mrf.mxu0
        %904 = vdwg.mxu0
        %v905 = vsel %vm819, %v792, 0
        %v907 = vsel %vm819, %v794, 0
        %v910 = vsel %vm819, %v805, 0
        %v913 = vsel %vm819, %v806, 0
        %915 = vmatprep.subr.mxu0 0.0
        %916 = vmatpush1.xpose.msra.mxu0 0.0
        %917 = vmatprep.subr.mxu0 0.0
        %918 = vmatpush1.xpose.msra.mxu0 0.0
        %919 = vmatprep.subr.mxu0 0.0
        %920 = vmatpush1.xpose.msra.mxu0 0.0
        %921 = vmatprep.subr.mxu0 0.0
        %922 = vmatpush1.xpose.msra.mxu0 0.0
        %923 = vmatprep.subr.mxu0 0.0
        %924 = vmatpush1.xpose.msra.mxu0 0.0
        %925 = vmatprep.subr.mxu0 0.0
        %926 = vmatpush1.xpose.msra.mxu0 0.0
        %927 = vmatprep.subr.mxu0 0.0
        %928 = vmatpush1.xpose.msra.mxu0 0.0
        %929 = vmatprep.subr.mxu0 0.0
        %930 = vmatpush1.xpose.msra.mxu0 0.0
        %931 = vmatprep.subr.mxu0 0.0
        %932 = vmatpush1.xpose.msra.mxu0 0.0
        %933 = vmatprep.subr.mxu0 0.0
        %934 = vmatpush1.xpose.msra.mxu0 0.0
        %935 = vmatprep.subr.mxu0 0.0
        %936 = vmatpush1.xpose.msra.mxu0 0.0
        %937 = vmatprep.subr.mxu0 0.0
        %938 = vmatpush1.xpose.msra.mxu0 0.0
        %939 = vmatprep.subr.mxu0 0.0
        %940 = vmatpush1.xpose.msra.mxu0 0.0
        %941 = vmatprep.subr.mxu0 0.0
        %942 = vmatpush1.xpose.msra.mxu0 0.0
        %943 = vmatprep.subr.mxu0 0.0
        %944 = vmatpush1.xpose.msra.mxu0 %v913
        %945 = vmatprep.subr.mxu0 0.0
        %946 = vmatpush1.xpose.msra.mxu0 %v910
        %947 = vmatprep.subr.mxu0 0.0
        %948 = vmatpush2.xpose.msra.mxu0 0.0
        %949 = vmatprep.subr.mxu0 0.0
        %950 = vmatpush2.xpose.msra.mxu0 0.0
        %951 = vmatprep.subr.mxu0 0.0
        %952 = vmatpush2.xpose.msra.mxu0 0.0
        %953 = vmatprep.subr.mxu0 0.0
        %954 = vmatpush2.xpose.msra.mxu0 0.0
        %955 = vmatprep.subr.mxu0 0.0
        %956 = vmatpush2.xpose.msra.mxu0 0.0
        %957 = vmatprep.subr.mxu0 0.0
        %958 = vmatpush2.xpose.msra.mxu0 0.0
        %959 = vmatprep.subr.mxu0 0.0
        %960 = vmatpush2.xpose.msra.mxu0 0.0
        %961 = vmatprep.subr.mxu0 0.0
        %962 = vmatpush2.xpose.msra.mxu0 0.0
        %963 = vmatprep.subr.mxu0 0.0
        %964 = vmatpush2.xpose.msra.mxu0 0.0
        %965 = vmatprep.subr.mxu0 0.0
        %966 = vmatpush2.xpose.msra.mxu0 0.0
        %967 = vmatprep.subr.mxu0 0.0
        %968 = vmatpush2.xpose.msra.mxu0 0.0
        %969 = vmatprep.subr.mxu0 0.0
        %970 = vmatpush2.xpose.msra.mxu0 0.0
        %971 = vmatprep.subr.mxu0 0.0
        %972 = vmatpush2.xpose.msra.mxu0 0.0
        %973 = vmatprep.subr.mxu0 0.0
        %974 = vmatpush2.xpose.msra.mxu0 0.0
        %975 = vmatprep.subr.mxu0 0.0
        %976 = vmatpush2.xpose.msra.mxu0 0.0
        %977 = vmatprep.subr.mxu0 0.0
        %978 = vmatpush2.xpose.msra.mxu0 0.0
        %979 = vmatprep.mubr.f32.mxu0 0.0
        %980 = vmatmul.mubr.f32.gmra.mxu0 %v905
        %v981 = vpop.f32.mrf.mxu0
        %v982 = vadd.f32 0.0, %v981
        %v983 = vpop.f32.mrf.mxu0
        %984 = vmatprep.mubr.f32.mxu0 0.0
        %985 = vmatmul.mubr.f32.gmra.mxu0 %v907
        %v986 = vpop.f32.mrf.mxu0
        %v987 = vadd.f32 0.0, %v986
        %v988 = vpop.f32.mrf.mxu0
        %989 = vdwg.mxu0
        %v990 = vsel %vm819, %v796, 0
        %v992 = vsel %vm819, %v798, 0
        %v995 = vsel %vm819, %v807, 0
        %v998 = vsel %vm819, %v808, 0
        %1000 = vmatprep.subr.mxu0 0.0
        %1001 = vmatpush1.xpose.msra.mxu0 0.0
        %1002 = vmatprep.subr.mxu0 0.0
        %1003 = vmatpush1.xpose.msra.mxu0 0.0
        %1004 = vmatprep.subr.mxu0 0.0
        %1005 = vmatpush1.xpose.msra.mxu0 0.0
        %1006 = vmatprep.subr.mxu0 0.0
        %1007 = vmatpush1.xpose.msra.mxu0 0.0
        %1008 = vmatprep.subr.mxu0 0.0
        %1009 = vmatpush1.xpose.msra.mxu0 0.0
        %1010 = vmatprep.subr.mxu0 0.0
        %1011 = vmatpush1.xpose.msra.mxu0 0.0
        %1012 = vmatprep.subr.mxu0 0.0
        %1013 = vmatpush1.xpose.msra.mxu0 0.0
        %1014 = vmatprep.subr.mxu0 0.0
        %1015 = vmatpush1.xpose.msra.mxu0 0.0
        %1016 = vmatprep.subr.mxu0 0.0
        %1017 = vmatpush1.xpose.msra.mxu0 0.0
        %1018 = vmatprep.subr.mxu0 0.0
        %1019 = vmatpush1.xpose.msra.mxu0 0.0
        %1020 = vmatprep.subr.mxu0 0.0
        %1021 = vmatpush1.xpose.msra.mxu0 0.0
        %1022 = vmatprep.subr.mxu0 0.0
        %1023 = vmatpush1.xpose.msra.mxu0 0.0
        %1024 = vmatprep.subr.mxu0 0.0
        %1025 = vmatpush1.xpose.msra.mxu0 0.0
        %1026 = vmatprep.subr.mxu0 0.0
        %1027 = vmatpush1.xpose.msra.mxu0 0.0
        %1028 = vmatprep.subr.mxu0 0.0
        %1029 = vmatpush1.xpose.msra.mxu0 %v998
        %1030 = vmatprep.subr.mxu0 0.0
        %1031 = vmatpush1.xpose.msra.mxu0 %v995
        %1032 = vmatprep.subr.mxu0 0.0
        %1033 = vmatpush2.xpose.msra.mxu0 0.0
        %1034 = vmatprep.subr.mxu0 0.0
        %1035 = vmatpush2.xpose.msra.mxu0 0.0
        %1036 = vmatprep.subr.mxu0 0.0
        %1037 = vmatpush2.xpose.msra.mxu0 0.0
        %1038 = vmatprep.subr.mxu0 0.0
        %1039 = vmatpush2.xpose.msra.mxu0 0.0
        %1040 = vmatprep.subr.mxu0 0.0
        %1041 = vmatpush2.xpose.msra.mxu0 0.0
        %1042 = vmatprep.subr.mxu0 0.0
        %1043 = vmatpush2.xpose.msra.mxu0 0.0
        %1044 = vmatprep.subr.mxu0 0.0
        %1045 = vmatpush2.xpose.msra.mxu0 0.0
        %1046 = vmatprep.subr.mxu0 0.0
        %1047 = vmatpush2.xpose.msra.mxu0 0.0
        %1048 = vmatprep.subr.mxu0 0.0
        %1049 = vmatpush2.xpose.msra.mxu0 0.0
        %1050 = vmatprep.subr.mxu0 0.0
        %1051 = vmatpush2.xpose.msra.mxu0 0.0
        %1052 = vmatprep.subr.mxu0 0.0
        %1053 = vmatpush2.xpose.msra.mxu0 0.0
        %1054 = vmatprep.subr.mxu0 0.0
        %1055 = vmatpush2.xpose.msra.mxu0 0.0
        %1056 = vmatprep.subr.mxu0 0.0
        %1057 = vmatpush2.xpose.msra.mxu0 0.0
        %1058 = vmatprep.subr.mxu0 0.0
        %1059 = vmatpush2.xpose.msra.mxu0 0.0
        %1060 = vmatprep.subr.mxu0 0.0
        %1061 = vmatpush2.xpose.msra.mxu0 0.0
        %1062 = vmatprep.subr.mxu0 0.0
        %1063 = vmatpush2.xpose.msra.mxu0 0.0
        %1064 = vmatprep.mubr.f32.mxu0 0.0
        %1065 = vmatmul.mubr.f32.gmra.mxu0 %v990
        %v1066 = vpop.f32.mrf.mxu0
        %v1067 = vadd.f32 0.0, %v1066
        %v1068 = vpop.f32.mrf.mxu0
        %1069 = vmatprep.mubr.f32.mxu0 0.0
        %1070 = vmatmul.mubr.f32.gmra.mxu0 %v992
        %v1071 = vpop.f32.mrf.mxu0
        %v1072 = vadd.f32 0.0, %v1071
        %v1073 = vpop.f32.mrf.mxu0
        %1074 = vdwg.mxu0
        %v1075 = vsel %vm819, %v800, 0
        %v1077 = vsel %vm819, %v802, 0
        %v1080 = vsel %vm819, %v809, 0
        %v1083 = vsel %vm819, %v810, 0
        %1085 = vmatprep.subr.mxu0 0.0
        %1086 = vmatpush1.xpose.msra.mxu0 0.0
        %1087 = vmatprep.subr.mxu0 0.0
        %1088 = vmatpush1.xpose.msra.mxu0 0.0
        %1089 = vmatprep.subr.mxu0 0.0
        %1090 = vmatpush1.xpose.msra.mxu0 0.0
        %1091 = vmatprep.subr.mxu0 0.0
        %1092 = vmatpush1.xpose.msra.mxu0 0.0
        %1093 = vmatprep.subr.mxu0 0.0
        %1094 = vmatpush1.xpose.msra.mxu0 0.0
        %1095 = vmatprep.subr.mxu0 0.0
        %1096 = vmatpush1.xpose.msra.mxu0 0.0
        %1097 = vmatprep.subr.mxu0 0.0
        %1098 = vmatpush1.xpose.msra.mxu0 0.0
        %1099 = vmatprep.subr.mxu0 0.0
        %1100 = vmatpush1.xpose.msra.mxu0 0.0
        %1101 = vmatprep.subr.mxu0 0.0
        %1102 = vmatpush1.xpose.msra.mxu0 0.0
        %1103 = vmatprep.subr.mxu0 0.0
        %1104 = vmatpush1.xpose.msra.mxu0 0.0
        %1105 = vmatprep.subr.mxu0 0.0
        %1106 = vmatpush1.xpose.msra.mxu0 0.0
        %1107 = vmatprep.subr.mxu0 0.0
        %1108 = vmatpush1.xpose.msra.mxu0 0.0
        %1109 = vmatprep.subr.mxu0 0.0
        %1110 = vmatpush1.xpose.msra.mxu0 0.0
        %1111 = vmatprep.subr.mxu0 0.0
        %1112 = vmatpush1.xpose.msra.mxu0 0.0
        %1113 = vmatprep.subr.mxu0 0.0
        %1114 = vmatpush1.xpose.msra.mxu0 %v1083
        %1115 = vmatprep.subr.mxu0 0.0
        %1116 = vmatpush1.xpose.msra.mxu0 %v1080
        %1117 = vmatprep.subr.mxu0 0.0
        %1118 = vmatpush2.xpose.msra.mxu0 0.0
        %1119 = vmatprep.subr.mxu0 0.0
        %1120 = vmatpush2.xpose.msra.mxu0 0.0
        %1121 = vmatprep.subr.mxu0 0.0
        %1122 = vmatpush2.xpose.msra.mxu0 0.0
        %1123 = vmatprep.subr.mxu0 0.0
        %1124 = vmatpush2.xpose.msra.mxu0 0.0
        %1125 = vmatprep.subr.mxu0 0.0
        %1126 = vmatpush2.xpose.msra.mxu0 0.0
        %1127 = vmatprep.subr.mxu0 0.0
        %1128 = vmatpush2.xpose.msra.mxu0 0.0
        %1129 = vmatprep.subr.mxu0 0.0
        %1130 = vmatpush2.xpose.msra.mxu0 0.0
        %1131 = vmatprep.subr.mxu0 0.0
        %1132 = vmatpush2.xpose.msra.mxu0 0.0
        %1133 = vmatprep.subr.mxu0 0.0
        %1134 = vmatpush2.xpose.msra.mxu0 0.0
        %1135 = vmatprep.subr.mxu0 0.0
        %1136 = vmatpush2.xpose.msra.mxu0 0.0
        %1137 = vmatprep.subr.mxu0 0.0
        %1138 = vmatpush2.xpose.msra.mxu0 0.0
        %1139 = vmatprep.subr.mxu0 0.0
        %1140 = vmatpush2.xpose.msra.mxu0 0.0
        %1141 = vmatprep.subr.mxu0 0.0
        %1142 = vmatpush2.xpose.msra.mxu0 0.0
        %1143 = vmatprep.subr.mxu0 0.0
        %1144 = vmatpush2.xpose.msra.mxu0 0.0
        %1145 = vmatprep.subr.mxu0 0.0
        %1146 = vmatpush2.xpose.msra.mxu0 0.0
        %1147 = vmatprep.subr.mxu0 0.0
        %1148 = vmatpush2.xpose.msra.mxu0 0.0
        %1149 = vmatprep.mubr.f32.mxu0 0.0
        %1150 = vmatmul.mubr.f32.gmra.mxu0 %v1075
        %v1151 = vpop.f32.mrf.mxu0
        %v1152 = vadd.f32 0.0, %v1151
        %v1153 = vpop.f32.mrf.mxu0
        %1154 = vmatprep.mubr.f32.mxu0 0.0
        %1155 = vmatmul.mubr.f32.gmra.mxu0 %v1077
        %v1156 = vpop.f32.mrf.mxu0
        %v1157 = vadd.f32 0.0, %v1156
        %v1158 = vpop.f32.mrf.mxu0
        %1159 = vdwg.mxu0
        %v1160 = vld [vmem:[%s437] sm:$0xff]
        %v1161 = vld [vmem:[%s437 + $0x8] sm:$0xff]
        %vm1162 = vcmp.eq.f32.partialorder %v1160, 0.0
        %vm1163 = vcmp.eq.f32.partialorder %v1161, 0.0
        %v1164 = vsel %vm1162, 1, 0
        %v1165 = vsel %vm1163, 1, 0
        %vm1166 = vcmp.eq.s32.totalorder %v1164, 1
        %vm1167 = vcmp.eq.s32.totalorder %v1165, 1
        %v1168 = vsel %vm1166, -1e+09, %v897
        %v1169 = vsel %vm1167, -1e+09, %v902
        %v1170 = vsel %vm1166, -1e+09, %v982
        %v1171 = vsel %vm1167, -1e+09, %v987
        %v1172 = vsel %vm1166, -1e+09, %v1067
        %v1173 = vsel %vm1167, -1e+09, %v1072
        %v1174 = vsel %vm1166, -1e+09, %v1152
        %v1175 = vsel %vm1167, -1e+09, %v1157
        %vm1176 = vcmask 130048
        %v1177 = vsel %vm1176, %v1168, -inf
        %1178 = vmax.xlane.f32.xlu0 %v1177
        %v1179 = vpop.xlane.xlu0 %1178
        %v1180 = vsel %vm1176, %v1169, -inf
        %1181 = vmax.xlane.f32.xlu0 %v1180
        %v1182 = vpop.xlane.xlu0 %1181
        %v1183 = vsel %vm1176, %v1170, -inf
        %1184 = vmax.xlane.f32.xlu0 %v1183
        %v1185 = vpop.xlane.xlu0 %1184
        %v1186 = vsel %vm1176, %v1171, -inf
        %1187 = vmax.xlane.f32.xlu0 %v1186
        %v1188 = vpop.xlane.xlu0 %1187
        %v1189 = vsel %vm1176, %v1172, -inf
        %1190 = vmax.xlane.f32.xlu0 %v1189
        %v1191 = vpop.xlane.xlu0 %1190
        %v1192 = vsel %vm1176, %v1173, -inf
        %1193 = vmax.xlane.f32.xlu0 %v1192
        %v1194 = vpop.xlane.xlu0 %1193
        %v1195 = vsel %vm1176, %v1174, -inf
        %1196 = vmax.xlane.f32.xlu0 %v1195
        %v1197 = vpop.xlane.xlu0 %1196
        %v1198 = vsel %vm1176, %v1175, -inf
        %1199 = vmax.xlane.f32.xlu0 %v1198
        %v1200 = vpop.xlane.xlu0 %1199
        %v1201 = vsub.f32 %v1168, %v1179
        %v1202 = vsub.f32 %v1169, %v1182
        %v1203 = vsub.f32 %v1170, %v1185
        %v1204 = vsub.f32 %v1171, %v1188
        %v1205 = vsub.f32 %v1172, %v1191
        %v1206 = vsub.f32 %v1173, %v1194
        %v1207 = vsub.f32 %v1174, %v1197
        %v1208 = vsub.f32 %v1175, %v1200
        %v1209 = vmul.f32 %v1201, 1.442695
        %v1210 = vpow.pop %v1209
        %v1211 = vmul.f32 %v1202, 1.442695
        %v1212 = vpow.pop %v1211
        %v1213 = vmul.f32 %v1203, 1.442695
        %v1214 = vpow.pop %v1213
        %v1215 = vmul.f32 %v1204, 1.442695
        %v1216 = vpow.pop %v1215
        %v1217 = vmul.f32 %v1205, 1.442695
        %v1218 = vpow.pop %v1217
        %v1219 = vmul.f32 %v1206, 1.442695
        %v1220 = vpow.pop %v1219
        %v1221 = vmul.f32 %v1207, 1.442695
        %v1222 = vpow.pop %v1221
        %v1223 = vmul.f32 %v1208, 1.442695
        %v1224 = vpow.pop %v1223
        %v1225 = vsel %vm1176, %v1210, 0.0
        %1226 = vadd.xlane.f32.xlu0 %v1225
        %v1227 = vpop.xlane.xlu0 %1226
        %v1228 = vsel %vm1176, %v1212, 0.0
        %1229 = vadd.xlane.f32.xlu0 %v1228
        %v1230 = vpop.xlane.xlu0 %1229
        %v1231 = vsel %vm1176, %v1214, 0.0
        %1232 = vadd.xlane.f32.xlu0 %v1231
        %v1233 = vpop.xlane.xlu0 %1232
        %v1234 = vsel %vm1176, %v1216, 0.0
        %1235 = vadd.xlane.f32.xlu0 %v1234
        %v1236 = vpop.xlane.xlu0 %1235
        %v1237 = vsel %vm1176, %v1218, 0.0
        %1238 = vadd.xlane.f32.xlu0 %v1237
        %v1239 = vpop.xlane.xlu0 %1238
        %v1240 = vsel %vm1176, %v1220, 0.0
        %1241 = vadd.xlane.f32.xlu0 %v1240
        %v1242 = vpop.xlane.xlu0 %1241
        %v1243 = vsel %vm1176, %v1222, 0.0
        %1244 = vadd.xlane.f32.xlu0 %v1243
        %v1245 = vpop.xlane.xlu0 %1244
        %v1246 = vsel %vm1176, %v1224, 0.0
        %1247 = vadd.xlane.f32.xlu0 %v1246
        %v1248 = vpop.xlane.xlu0 %1247
        %v1249 = vrcp.pop %v1227
        %v1250 = vrcp.pop %v1230
        %v1251 = vrcp.pop %v1233
        %v1252 = vrcp.pop %v1236
        %v1253 = vrcp.pop %v1239
        %v1254 = vrcp.pop %v1242
        %v1255 = vrcp.pop %v1245
        %v1256 = vrcp.pop %v1248
        %v1257 = vmul.f32 %v1210, %v1249
        %v1258 = vmul.f32 %v1212, %v1250
        %v1259 = vmul.f32 %v1214, %v1251
        %v1260 = vmul.f32 %v1216, %v1252
        %v1261 = vmul.f32 %v1218, %v1253
        %v1262 = vmul.f32 %v1220, %v1254
        %v1263 = vmul.f32 %v1222, %v1255
        %v1264 = vmul.f32 %v1224, %v1256
        %v1266 = vsel %vm1176, %v1257, 0
        %v1269 = vsel %vm1176, %v1258, 0
        %1271 = vmatprep.subr.mxu0 0.0
        %1272 = vmatpush1.msra.mxu0 0.0
        %1273 = vmatprep.subr.mxu0 0.0
        %1274 = vmatpush1.msra.mxu0 0.0
        %1275 = vmatprep.subr.mxu0 0.0
        %1276 = vmatpush1.msra.mxu0 0.0
        %1277 = vmatprep.subr.mxu0 0.0
        %1278 = vmatpush1.msra.mxu0 0.0
        %1279 = vmatprep.subr.mxu0 0.0
        %1280 = vmatpush1.msra.mxu0 0.0
        %1281 = vmatprep.subr.mxu0 0.0
        %1282 = vmatpush1.msra.mxu0 0.0
        %1283 = vmatprep.subr.mxu0 0.0
        %1284 = vmatpush1.msra.mxu0 0.0
        %1285 = vmatprep.subr.mxu0 0.0
        %1286 = vmatpush1.msra.mxu0 0.0
        %1287 = vmatprep.subr.mxu0 0.0
        %1288 = vmatpush1.msra.mxu0 0.0
        %1289 = vmatprep.subr.mxu0 0.0
        %1290 = vmatpush1.msra.mxu0 0.0
        %1291 = vmatprep.subr.mxu0 0.0
        %1292 = vmatpush1.msra.mxu0 0.0
        %1293 = vmatprep.subr.mxu0 0.0
        %1294 = vmatpush1.msra.mxu0 0.0
        %1295 = vmatprep.subr.mxu0 0.0
        %1296 = vmatpush1.msra.mxu0 0.0
        %1297 = vmatprep.subr.mxu0 0.0
        %1298 = vmatpush1.msra.mxu0 0.0
        %1299 = vmatprep.subr.mxu0 0.0
        %1300 = vmatpush1.msra.mxu0 %v812
        %1301 = vmatprep.subr.mxu0 0.0
        %1302 = vmatpush1.msra.mxu0 %v811
        %1303 = vmatprep.subr.mxu0 0.0
        %1304 = vmatpush2.msra.mxu0 0.0
        %1305 = vmatprep.subr.mxu0 0.0
        %1306 = vmatpush2.msra.mxu0 0.0
        %1307 = vmatprep.subr.mxu0 0.0
        %1308 = vmatpush2.msra.mxu0 0.0
        %1309 = vmatprep.subr.mxu0 0.0
        %1310 = vmatpush2.msra.mxu0 0.0
        %1311 = vmatprep.subr.mxu0 0.0
        %1312 = vmatpush2.msra.mxu0 0.0
        %1313 = vmatprep.subr.mxu0 0.0
        %1314 = vmatpush2.msra.mxu0 0.0
        %1315 = vmatprep.subr.mxu0 0.0
        %1316 = vmatpush2.msra.mxu0 0.0
        %1317 = vmatprep.subr.mxu0 0.0
        %1318 = vmatpush2.msra.mxu0 0.0
        %1319 = vmatprep.subr.mxu0 0.0
        %1320 = vmatpush2.msra.mxu0 0.0
        %1321 = vmatprep.subr.mxu0 0.0
        %1322 = vmatpush2.msra.mxu0 0.0
        %1323 = vmatprep.subr.mxu0 0.0
        %1324 = vmatpush2.msra.mxu0 0.0
        %1325 = vmatprep.subr.mxu0 0.0
        %1326 = vmatpush2.msra.mxu0 0.0
        %1327 = vmatprep.subr.mxu0 0.0
        %1328 = vmatpush2.msra.mxu0 0.0
        %1329 = vmatprep.subr.mxu0 0.0
        %1330 = vmatpush2.msra.mxu0 0.0
        %1331 = vmatprep.subr.mxu0 0.0
        %1332 = vmatpush2.msra.mxu0 0.0
        %1333 = vmatprep.subr.mxu0 0.0
        %1334 = vmatpush2.msra.mxu0 0.0
        %1335 = vmatprep.mubr.f32.mxu0 0.0
        %1336 = vmatmul.mubr.f32.gmra.mxu0 %v1266
        %v1337 = vpop.f32.mrf.mxu0
        %v1338 = vadd.f32 0.0, %v1337
        %v1339 = vpop.f32.mrf.mxu0
        %1340 = vmatprep.mubr.f32.mxu0 0.0
        %1341 = vmatmul.mubr.f32.gmra.mxu0 %v1269
        %v1342 = vpop.f32.mrf.mxu0
        %v1343 = vadd.f32 0.0, %v1342
        %v1344 = vpop.f32.mrf.mxu0
        %1345 = vdwg.mxu0
        %v1347 = vsel %vm1176, %v1259, 0
        %v1350 = vsel %vm1176, %v1260, 0
        %1352 = vmatprep.subr.mxu0 0.0
        %1353 = vmatpush1.msra.mxu0 0.0
        %1354 = vmatprep.subr.mxu0 0.0
        %1355 = vmatpush1.msra.mxu0 0.0
        %1356 = vmatprep.subr.mxu0 0.0
        %1357 = vmatpush1.msra.mxu0 0.0
        %1358 = vmatprep.subr.mxu0 0.0
        %1359 = vmatpush1.msra.mxu0 0.0
        %1360 = vmatprep.subr.mxu0 0.0
        %1361 = vmatpush1.msra.mxu0 0.0
        %1362 = vmatprep.subr.mxu0 0.0
        %1363 = vmatpush1.msra.mxu0 0.0
        %1364 = vmatprep.subr.mxu0 0.0
        %1365 = vmatpush1.msra.mxu0 0.0
        %1366 = vmatprep.subr.mxu0 0.0
        %1367 = vmatpush1.msra.mxu0 0.0
        %1368 = vmatprep.subr.mxu0 0.0
        %1369 = vmatpush1.msra.mxu0 0.0
        %1370 = vmatprep.subr.mxu0 0.0
        %1371 = vmatpush1.msra.mxu0 0.0
        %1372 = vmatprep.subr.mxu0 0.0
        %1373 = vmatpush1.msra.mxu0 0.0
        %1374 = vmatprep.subr.mxu0 0.0
        %1375 = vmatpush1.msra.mxu0 0.0
        %1376 = vmatprep.subr.mxu0 0.0
        %1377 = vmatpush1.msra.mxu0 0.0
        %1378 = vmatprep.subr.mxu0 0.0
        %1379 = vmatpush1.msra.mxu0 0.0
        %1380 = vmatprep.subr.mxu0 0.0
        %1381 = vmatpush1.msra.mxu0 %v814
        %1382 = vmatprep.subr.mxu0 0.0
        %1383 = vmatpush1.msra.mxu0 %v813
        %1384 = vmatprep.subr.mxu0 0.0
        %1385 = vmatpush2.msra.mxu0 0.0
        %1386 = vmatprep.subr.mxu0 0.0
        %1387 = vmatpush2.msra.mxu0 0.0
        %1388 = vmatprep.subr.mxu0 0.0
        %1389 = vmatpush2.msra.mxu0 0.0
        %1390 = vmatprep.subr.mxu0 0.0
        %1391 = vmatpush2.msra.mxu0 0.0
        %1392 = vmatprep.subr.mxu0 0.0
        %1393 = vmatpush2.msra.mxu0 0.0
        %1394 = vmatprep.subr.mxu0 0.0
        %1395 = vmatpush2.msra.mxu0 0.0
        %1396 = vmatprep.subr.mxu0 0.0
        %1397 = vmatpush2.msra.mxu0 0.0
        %1398 = vmatprep.subr.mxu0 0.0
        %1399 = vmatpush2.msra.mxu0 0.0
        %1400 = vmatprep.subr.mxu0 0.0
        %1401 = vmatpush2.msra.mxu0 0.0
        %1402 = vmatprep.subr.mxu0 0.0
        %1403 = vmatpush2.msra.mxu0 0.0
        %1404 = vmatprep.subr.mxu0 0.0
        %1405 = vmatpush2.msra.mxu0 0.0
        %1406 = vmatprep.subr.mxu0 0.0
        %1407 = vmatpush2.msra.mxu0 0.0
        %1408 = vmatprep.subr.mxu0 0.0
        %1409 = vmatpush2.msra.mxu0 0.0
        %1410 = vmatprep.subr.mxu0 0.0
        %1411 = vmatpush2.msra.mxu0 0.0
        %1412 = vmatprep.subr.mxu0 0.0
        %1413 = vmatpush2.msra.mxu0 0.0
        %1414 = vmatprep.subr.mxu0 0.0
        %1415 = vmatpush2.msra.mxu0 0.0
        %1416 = vmatprep.mubr.f32.mxu0 0.0
        %1417 = vmatmul.mubr.f32.gmra.mxu0 %v1347
        %v1418 = vpop.f32.mrf.mxu0
        %v1419 = vadd.f32 0.0, %v1418
        %v1420 = vpop.f32.mrf.mxu0
        %1421 = vmatprep.mubr.f32.mxu0 0.0
        %1422 = vmatmul.mubr.f32.gmra.mxu0 %v1350
        %v1423 = vpop.f32.mrf.mxu0
        %v1424 = vadd.f32 0.0, %v1423
        %v1425 = vpop.f32.mrf.mxu0
        %1426 = vdwg.mxu0
        %v1428 = vsel %vm1176, %v1261, 0
        %v1431 = vsel %vm1176, %v1262, 0
        %1433 = vmatprep.subr.mxu0 0.0
        %1434 = vmatpush1.msra.mxu0 0.0
        %1435 = vmatprep.subr.mxu0 0.0
        %1436 = vmatpush1.msra.mxu0 0.0
        %1437 = vmatprep.subr.mxu0 0.0
        %1438 = vmatpush1.msra.mxu0 0.0
        %1439 = vmatprep.subr.mxu0 0.0
        %1440 = vmatpush1.msra.mxu0 0.0
        %1441 = vmatprep.subr.mxu0 0.0
        %1442 = vmatpush1.msra.mxu0 0.0
        %1443 = vmatprep.subr.mxu0 0.0
        %1444 = vmatpush1.msra.mxu0 0.0
        %1445 = vmatprep.subr.mxu0 0.0
        %1446 = vmatpush1.msra.mxu0 0.0
        %1447 = vmatprep.subr.mxu0 0.0
        %1448 = vmatpush1.msra.mxu0 0.0
        %1449 = vmatprep.subr.mxu0 0.0
        %1450 = vmatpush1.msra.mxu0 0.0
        %1451 = vmatprep.subr.mxu0 0.0
        %1452 = vmatpush1.msra.mxu0 0.0
        %1453 = vmatprep.subr.mxu0 0.0
        %1454 = vmatpush1.msra.mxu0 0.0
        %1455 = vmatprep.subr.mxu0 0.0
        %1456 = vmatpush1.msra.mxu0 0.0
        %1457 = vmatprep.subr.mxu0 0.0
        %1458 = vmatpush1.msra.mxu0 0.0
        %1459 = vmatprep.subr.mxu0 0.0
        %1460 = vmatpush1.msra.mxu0 0.0
        %1461 = vmatprep.subr.mxu0 0.0
        %1462 = vmatpush1.msra.mxu0 %v816
        %1463 = vmatprep.subr.mxu0 0.0
        %1464 = vmatpush1.msra.mxu0 %v815
        %1465 = vmatprep.subr.mxu0 0.0
        %1466 = vmatpush2.msra.mxu0 0.0
        %1467 = vmatprep.subr.mxu0 0.0
        %1468 = vmatpush2.msra.mxu0 0.0
        %1469 = vmatprep.subr.mxu0 0.0
        %1470 = vmatpush2.msra.mxu0 0.0
        %1471 = vmatprep.subr.mxu0 0.0
        %1472 = vmatpush2.msra.mxu0 0.0
        %1473 = vmatprep.subr.mxu0 0.0
        %1474 = vmatpush2.msra.mxu0 0.0
        %1475 = vmatprep.subr.mxu0 0.0
        %1476 = vmatpush2.msra.mxu0 0.0
        %1477 = vmatprep.subr.mxu0 0.0
        %1478 = vmatpush2.msra.mxu0 0.0
        %1479 = vmatprep.subr.mxu0 0.0
        %1480 = vmatpush2.msra.mxu0 0.0
        %1481 = vmatprep.subr.mxu0 0.0
        %1482 = vmatpush2.msra.mxu0 0.0
        %1483 = vmatprep.subr.mxu0 0.0
        %1484 = vmatpush2.msra.mxu0 0.0
        %1485 = vmatprep.subr.mxu0 0.0
        %1486 = vmatpush2.msra.mxu0 0.0
        %1487 = vmatprep.subr.mxu0 0.0
        %1488 = vmatpush2.msra.mxu0 0.0
        %1489 = vmatprep.subr.mxu0 0.0
        %1490 = vmatpush2.msra.mxu0 0.0
        %1491 = vmatprep.subr.mxu0 0.0
        %1492 = vmatpush2.msra.mxu0 0.0
        %1493 = vmatprep.subr.mxu0 0.0
        %1494 = vmatpush2.msra.mxu0 0.0
        %1495 = vmatprep.subr.mxu0 0.0
        %1496 = vmatpush2.msra.mxu0 0.0
        %1497 = vmatprep.mubr.f32.mxu0 0.0
        %1498 = vmatmul.mubr.f32.gmra.mxu0 %v1428
        %v1499 = vpop.f32.mrf.mxu0
        %v1500 = vadd.f32 0.0, %v1499
        %v1501 = vpop.f32.mrf.mxu0
        %1502 = vmatprep.mubr.f32.mxu0 0.0
        %1503 = vmatmul.mubr.f32.gmra.mxu0 %v1431
        %v1504 = vpop.f32.mrf.mxu0
        %v1505 = vadd.f32 0.0, %v1504
        %v1506 = vpop.f32.mrf.mxu0
        %1507 = vdwg.mxu0
        %v1509 = vsel %vm1176, %v1263, 0
        %v1512 = vsel %vm1176, %v1264, 0
        %1514 = vmatprep.subr.mxu0 0.0
        %1515 = vmatpush1.msra.mxu0 0.0
        %1516 = vmatprep.subr.mxu0 0.0
        %1517 = vmatpush1.msra.mxu0 0.0
        %1518 = vmatprep.subr.mxu0 0.0
        %1519 = vmatpush1.msra.mxu0 0.0
        %1520 = vmatprep.subr.mxu0 0.0
        %1521 = vmatpush1.msra.mxu0 0.0
        %1522 = vmatprep.subr.mxu0 0.0
        %1523 = vmatpush1.msra.mxu0 0.0
        %1524 = vmatprep.subr.mxu0 0.0
        %1525 = vmatpush1.msra.mxu0 0.0
        %1526 = vmatprep.subr.mxu0 0.0
        %1527 = vmatpush1.msra.mxu0 0.0
        %1528 = vmatprep.subr.mxu0 0.0
        %1529 = vmatpush1.msra.mxu0 0.0
        %1530 = vmatprep.subr.mxu0 0.0
        %1531 = vmatpush1.msra.mxu0 0.0
        %1532 = vmatprep.subr.mxu0 0.0
        %1533 = vmatpush1.msra.mxu0 0.0
        %1534 = vmatprep.subr.mxu0 0.0
        %1535 = vmatpush1.msra.mxu0 0.0
        %1536 = vmatprep.subr.mxu0 0.0
        %1537 = vmatpush1.msra.mxu0 0.0
        %1538 = vmatprep.subr.mxu0 0.0
        %1539 = vmatpush1.msra.mxu0 0.0
        %1540 = vmatprep.subr.mxu0 0.0
        %1541 = vmatpush1.msra.mxu0 0.0
        %1542 = vmatprep.subr.mxu0 0.0
        %1543 = vmatpush1.msra.mxu0 %v818
        %1544 = vmatprep.subr.mxu0 0.0
        %1545 = vmatpush1.msra.mxu0 %v817
        %1546 = vmatprep.subr.mxu0 0.0
        %1547 = vmatpush2.msra.mxu0 0.0
        %1548 = vmatprep.subr.mxu0 0.0
        %1549 = vmatpush2.msra.mxu0 0.0
        %1550 = vmatprep.subr.mxu0 0.0
        %1551 = vmatpush2.msra.mxu0 0.0
        %1552 = vmatprep.subr.mxu0 0.0
        %1553 = vmatpush2.msra.mxu0 0.0
        %1554 = vmatprep.subr.mxu0 0.0
        %1555 = vmatpush2.msra.mxu0 0.0
        %1556 = vmatprep.subr.mxu0 0.0
        %1557 = vmatpush2.msra.mxu0 0.0
        %1558 = vmatprep.subr.mxu0 0.0
        %1559 = vmatpush2.msra.mxu0 0.0
        %1560 = vmatprep.subr.mxu0 0.0
        %1561 = vmatpush2.msra.mxu0 0.0
        %1562 = vmatprep.subr.mxu0 0.0
        %1563 = vmatpush2.msra.mxu0 0.0
        %1564 = vmatprep.subr.mxu0 0.0
        %1565 = vmatpush2.msra.mxu0 0.0
        %1566 = vmatprep.subr.mxu0 0.0
        %1567 = vmatpush2.msra.mxu0 0.0
        %1568 = vmatprep.subr.mxu0 0.0
        %1569 = vmatpush2.msra.mxu0 0.0
        %1570 = vmatprep.subr.mxu0 0.0
        %1571 = vmatpush2.msra.mxu0 0.0
        %1572 = vmatprep.subr.mxu0 0.0
        %1573 = vmatpush2.msra.mxu0 0.0
        %1574 = vmatprep.subr.mxu0 0.0
        %1575 = vmatpush2.msra.mxu0 0.0
        %1576 = vmatprep.subr.mxu0 0.0
        %1577 = vmatpush2.msra.mxu0 0.0
        %1578 = vmatprep.mubr.f32.mxu0 0.0
        %1579 = vmatmul.mubr.f32.gmra.mxu0 %v1509
        %v1580 = vpop.f32.mrf.mxu0
        %v1581 = vadd.f32 0.0, %v1580
        %v1582 = vpop.f32.mrf.mxu0
        %1583 = vmatprep.mubr.f32.mxu0 0.0
        %1584 = vmatmul.mubr.f32.gmra.mxu0 %v1512
        %v1585 = vpop.f32.mrf.mxu0
        %v1586 = vadd.f32 0.0, %v1585
        %v1587 = vpop.f32.mrf.mxu0
        %1588 = vdwg.mxu0
        %v1589 = vld [vmem:[%s8] sm:$0x1]
        %v1590 = vld [vmem:[#allocation13] sm:$0xff]
        %v1591 = vld [vmem:[#allocation13 + $0x8] sm:$0xff]
        %v1592 = vld [vmem:[#allocation13 + $0x10] sm:$0xff]
        %v1593 = vld [vmem:[#allocation13 + $0x18] sm:$0xff]
        %v1595 = vsel %vm819, %v1338, 0
        %v1598 = vsel %vm819, %v1343, 0
        %1600 = vmatprep.subr.mxu0 0.0
        %1601 = vmatpush1.msra.mxu0 0.0
        %1602 = vmatprep.subr.mxu0 0.0
        %1603 = vmatpush1.msra.mxu0 0.0
        %1604 = vmatprep.subr.mxu0 0.0
        %1605 = vmatpush1.msra.mxu0 0.0
        %1606 = vmatprep.subr.mxu0 0.0
        %1607 = vmatpush1.msra.mxu0 0.0
        %1608 = vmatprep.subr.mxu0 0.0
        %1609 = vmatpush1.msra.mxu0 0.0
        %1610 = vmatprep.subr.mxu0 0.0
        %1611 = vmatpush1.msra.mxu0 0.0
        %1612 = vmatprep.subr.mxu0 0.0
        %1613 = vmatpush1.msra.mxu0 0.0
        %1614 = vmatprep.subr.mxu0 0.0
        %1615 = vmatpush1.msra.mxu0 0.0
        %1616 = vmatprep.subr.mxu0 0.0
        %1617 = vmatpush1.msra.mxu0 0.0
        %1618 = vmatprep.subr.mxu0 0.0
        %1619 = vmatpush1.msra.mxu0 0.0
        %1620 = vmatprep.subr.mxu0 0.0
        %1621 = vmatpush1.msra.mxu0 0.0
        %1622 = vmatprep.subr.mxu0 0.0
        %1623 = vmatpush1.msra.mxu0 0.0
        %1624 = vmatprep.subr.mxu0 0.0
        %1625 = vmatpush1.msra.mxu0 %v1593
        %1626 = vmatprep.subr.mxu0 0.0
        %1627 = vmatpush1.msra.mxu0 %v1592
        %1628 = vmatprep.subr.mxu0 0.0
        %1629 = vmatpush1.msra.mxu0 %v1591
        %1630 = vmatprep.subr.mxu0 0.0
        %1631 = vmatpush1.msra.mxu0 %v1590
        %1632 = vmatprep.subr.mxu0 0.0
        %1633 = vmatpush2.msra.mxu0 0.0
        %1634 = vmatprep.subr.mxu0 0.0
        %1635 = vmatpush2.msra.mxu0 0.0
        %1636 = vmatprep.subr.mxu0 0.0
        %1637 = vmatpush2.msra.mxu0 0.0
        %1638 = vmatprep.subr.mxu0 0.0
        %1639 = vmatpush2.msra.mxu0 0.0
        %1640 = vmatprep.subr.mxu0 0.0
        %1641 = vmatpush2.msra.mxu0 0.0
        %1642 = vmatprep.subr.mxu0 0.0
        %1643 = vmatpush2.msra.mxu0 0.0
        %1644 = vmatprep.subr.mxu0 0.0
        %1645 = vmatpush2.msra.mxu0 0.0
        %1646 = vmatprep.subr.mxu0 0.0
        %1647 = vmatpush2.msra.mxu0 0.0
        %1648 = vmatprep.subr.mxu0 0.0
        %1649 = vmatpush2.msra.mxu0 0.0
        %1650 = vmatprep.subr.mxu0 0.0
        %1651 = vmatpush2.msra.mxu0 0.0
        %1652 = vmatprep.subr.mxu0 0.0
        %1653 = vmatpush2.msra.mxu0 0.0
        %1654 = vmatprep.subr.mxu0 0.0
        %1655 = vmatpush2.msra.mxu0 0.0
        %1656 = vmatprep.subr.mxu0 0.0
        %1657 = vmatpush2.msra.mxu0 0.0
        %1658 = vmatprep.subr.mxu0 0.0
        %1659 = vmatpush2.msra.mxu0 0.0
        %1660 = vmatprep.subr.mxu0 0.0
        %1661 = vmatpush2.msra.mxu0 0.0
        %1662 = vmatprep.subr.mxu0 0.0
        %1663 = vmatpush2.msra.mxu0 0.0
        %1664 = vmatprep.mubr.f32.mxu0 0.0
        %1665 = vmatmul.mubr.f32.gmra.mxu0 %v1595
        %v1666 = vpop.f32.mrf.mxu0
        %v1667 = vadd.f32 0.0, %v1666
        %v1668 = vpop.f32.mrf.mxu0
        %1669 = vmatprep.mubr.f32.mxu0 0.0
        %1670 = vmatmul.mubr.f32.gmra.mxu0 %v1598
        %v1671 = vpop.f32.mrf.mxu0
        %v1672 = vadd.f32 0.0, %v1671
        %v1673 = vpop.f32.mrf.mxu0
        %1674 = vdwg.mxu0
        %v1676 = vlaneseq
        %v1677 = vshrl.u32 %v1676, 7
        %v1678 = vsub.s32 0, %v1677
        %v1679 = vrot.slane %v1589, %v1678
        %v1681 = vadd.f32 %v1679, %v1667
        %v1682 = vadd.f32 %v1679, %v1672
        %s1683 = scalar_lea.vmem [#allocation13], 32
        %v1684 = vld [vmem:[%s1683] sm:$0xff]
        %v1685 = vld [vmem:[%s1683 + $0x8] sm:$0xff]
        %v1686 = vld [vmem:[%s1683 + $0x10] sm:$0xff]
        %v1687 = vld [vmem:[%s1683 + $0x18] sm:$0xff]
        %v1689 = vsel %vm819, %v1419, 0
        %v1692 = vsel %vm819, %v1424, 0
        %1694 = vmatprep.subr.mxu0 0.0
        %1695 = vmatpush1.msra.mxu0 0.0
        %1696 = vmatprep.subr.mxu0 0.0
        %1697 = vmatpush1.msra.mxu0 0.0
        %1698 = vmatprep.subr.mxu0 0.0
        %1699 = vmatpush1.msra.mxu0 0.0
        %1700 = vmatprep.subr.mxu0 0.0
        %1701 = vmatpush1.msra.mxu0 0.0
        %1702 = vmatprep.subr.mxu0 0.0
        %1703 = vmatpush1.msra.mxu0 0.0
        %1704 = vmatprep.subr.mxu0 0.0
        %1705 = vmatpush1.msra.mxu0 0.0
        %1706 = vmatprep.subr.mxu0 0.0
        %1707 = vmatpush1.msra.mxu0 0.0
        %1708 = vmatprep.subr.mxu0 0.0
        %1709 = vmatpush1.msra.mxu0 0.0
        %1710 = vmatprep.subr.mxu0 0.0
        %1711 = vmatpush1.msra.mxu0 0.0
        %1712 = vmatprep.subr.mxu0 0.0
        %1713 = vmatpush1.msra.mxu0 0.0
        %1714 = vmatprep.subr.mxu0 0.0
        %1715 = vmatpush1.msra.mxu0 0.0
        %1716 = vmatprep.subr.mxu0 0.0
        %1717 = vmatpush1.msra.mxu0 0.0
        %1718 = vmatprep.subr.mxu0 0.0
        %1719 = vmatpush1.msra.mxu0 %v1687
        %1720 = vmatprep.subr.mxu0 0.0
        %1721 = vmatpush1.msra.mxu0 %v1686
        %1722 = vmatprep.subr.mxu0 0.0
        %1723 = vmatpush1.msra.mxu0 %v1685
        %1724 = vmatprep.subr.mxu0 0.0
        %1725 = vmatpush1.msra.mxu0 %v1684
        %1726 = vmatprep.subr.mxu0 0.0
        %1727 = vmatpush2.msra.mxu0 0.0
        %1728 = vmatprep.subr.mxu0 0.0
        %1729 = vmatpush2.msra.mxu0 0.0
        %1730 = vmatprep.subr.mxu0 0.0
        %1731 = vmatpush2.msra.mxu0 0.0
        %1732 = vmatprep.subr.mxu0 0.0
        %1733 = vmatpush2.msra.mxu0 0.0
        %1734 = vmatprep.subr.mxu0 0.0
        %1735 = vmatpush2.msra.mxu0 0.0
        %1736 = vmatprep.subr.mxu0 0.0
        %1737 = vmatpush2.msra.mxu0 0.0
        %1738 = vmatprep.subr.mxu0 0.0
        %1739 = vmatpush2.msra.mxu0 0.0
        %1740 = vmatprep.subr.mxu0 0.0
        %1741 = vmatpush2.msra.mxu0 0.0
        %1742 = vmatprep.subr.mxu0 0.0
        %1743 = vmatpush2.msra.mxu0 0.0
        %1744 = vmatprep.subr.mxu0 0.0
        %1745 = vmatpush2.msra.mxu0 0.0
        %1746 = vmatprep.subr.mxu0 0.0
        %1747 = vmatpush2.msra.mxu0 0.0
        %1748 = vmatprep.subr.mxu0 0.0
        %1749 = vmatpush2.msra.mxu0 0.0
        %1750 = vmatprep.subr.mxu0 0.0
        %1751 = vmatpush2.msra.mxu0 0.0
        %1752 = vmatprep.subr.mxu0 0.0
        %1753 = vmatpush2.msra.mxu0 0.0
        %1754 = vmatprep.subr.mxu0 0.0
        %1755 = vmatpush2.msra.mxu0 0.0
        %1756 = vmatprep.subr.mxu0 0.0
        %1757 = vmatpush2.msra.mxu0 0.0
        %1758 = vmatprep.mubr.f32.mxu0 0.0
        %1759 = vmatmul.mubr.f32.gmra.mxu0 %v1689
        %v1760 = vpop.f32.mrf.mxu0
        %v1761 = vadd.f32 0.0, %v1760
        %v1762 = vpop.f32.mrf.mxu0
        %1763 = vmatprep.mubr.f32.mxu0 0.0
        %1764 = vmatmul.mubr.f32.gmra.mxu0 %v1692
        %v1765 = vpop.f32.mrf.mxu0
        %v1766 = vadd.f32 0.0, %v1765
        %v1767 = vpop.f32.mrf.mxu0
        %1768 = vdwg.mxu0
        %v1769 = vadd.f32 %v1681, %v1761
        %v1770 = vadd.f32 %v1682, %v1766
        %s1771 = scalar_lea.vmem [#allocation13], 64
        %v1772 = vld [vmem:[%s1771] sm:$0xff]
        %v1773 = vld [vmem:[%s1771 + $0x8] sm:$0xff]
        %v1774 = vld [vmem:[%s1771 + $0x10] sm:$0xff]
        %v1775 = vld [vmem:[%s1771 + $0x18] sm:$0xff]
        %v1777 = vsel %vm819, %v1500, 0
        %v1780 = vsel %vm819, %v1505, 0
        %1782 = vmatprep.subr.mxu0 0.0
        %1783 = vmatpush1.msra.mxu0 0.0
        %1784 = vmatprep.subr.mxu0 0.0
        %1785 = vmatpush1.msra.mxu0 0.0
        %1786 = vmatprep.subr.mxu0 0.0
        %1787 = vmatpush1.msra.mxu0 0.0
        %1788 = vmatprep.subr.mxu0 0.0
        %1789 = vmatpush1.msra.mxu0 0.0
        %1790 = vmatprep.subr.mxu0 0.0
        %1791 = vmatpush1.msra.mxu0 0.0
        %1792 = vmatprep.subr.mxu0 0.0
        %1793 = vmatpush1.msra.mxu0 0.0
        %1794 = vmatprep.subr.mxu0 0.0
        %1795 = vmatpush1.msra.mxu0 0.0
        %1796 = vmatprep.subr.mxu0 0.0
        %1797 = vmatpush1.msra.mxu0 0.0
        %1798 = vmatprep.subr.mxu0 0.0
        %1799 = vmatpush1.msra.mxu0 0.0
        %1800 = vmatprep.subr.mxu0 0.0
        %1801 = vmatpush1.msra.mxu0 0.0
        %1802 = vmatprep.subr.mxu0 0.0
        %1803 = vmatpush1.msra.mxu0 0.0
        %1804 = vmatprep.subr.mxu0 0.0
        %1805 = vmatpush1.msra.mxu0 0.0
        %1806 = vmatprep.subr.mxu0 0.0
        %1807 = vmatpush1.msra.mxu0 %v1775
        %1808 = vmatprep.subr.mxu0 0.0
        %1809 = vmatpush1.msra.mxu0 %v1774
        %1810 = vmatprep.subr.mxu0 0.0
        %1811 = vmatpush1.msra.mxu0 %v1773
        %1812 = vmatprep.subr.mxu0 0.0
        %1813 = vmatpush1.msra.mxu0 %v1772
        %1814 = vmatprep.subr.mxu0 0.0
        %1815 = vmatpush2.msra.mxu0 0.0
        %1816 = vmatprep.subr.mxu0 0.0
        %1817 = vmatpush2.msra.mxu0 0.0
        %1818 = vmatprep.subr.mxu0 0.0
        %1819 = vmatpush2.msra.mxu0 0.0
        %1820 = vmatprep.subr.mxu0 0.0
        %1821 = vmatpush2.msra.mxu0 0.0
        %1822 = vmatprep.subr.mxu0 0.0
        %1823 = vmatpush2.msra.mxu0 0.0
        %1824 = vmatprep.subr.mxu0 0.0
        %1825 = vmatpush2.msra.mxu0 0.0
        %1826 = vmatprep.subr.mxu0 0.0
        %1827 = vmatpush2.msra.mxu0 0.0
        %1828 = vmatprep.subr.mxu0 0.0
        %1829 = vmatpush2.msra.mxu0 0.0
        %1830 = vmatprep.subr.mxu0 0.0
        %1831 = vmatpush2.msra.mxu0 0.0
        %1832 = vmatprep.subr.mxu0 0.0
        %1833 = vmatpush2.msra.mxu0 0.0
        %1834 = vmatprep.subr.mxu0 0.0
        %1835 = vmatpush2.msra.mxu0 0.0
        %1836 = vmatprep.subr.mxu0 0.0
        %1837 = vmatpush2.msra.mxu0 0.0
        %1838 = vmatprep.subr.mxu0 0.0
        %1839 = vmatpush2.msra.mxu0 0.0
        %1840 = vmatprep.subr.mxu0 0.0
        %1841 = vmatpush2.msra.mxu0 0.0
        %1842 = vmatprep.subr.mxu0 0.0
        %1843 = vmatpush2.msra.mxu0 0.0
        %1844 = vmatprep.subr.mxu0 0.0
        %1845 = vmatpush2.msra.mxu0 0.0
        %1846 = vmatprep.mubr.f32.mxu0 0.0
        %1847 = vmatmul.mubr.f32.gmra.mxu0 %v1777
        %v1848 = vpop.f32.mrf.mxu0
        %v1849 = vadd.f32 0.0, %v1848
        %v1850 = vpop.f32.mrf.mxu0
        %1851 = vmatprep.mubr.f32.mxu0 0.0
        %1852 = vmatmul.mubr.f32.gmra.mxu0 %v1780
        %v1853 = vpop.f32.mrf.mxu0
        %v1854 = vadd.f32 0.0, %v1853
        %v1855 = vpop.f32.mrf.mxu0
        %1856 = vdwg.mxu0
        %v1857 = vadd.f32 %v1769, %v1849
        %v1858 = vadd.f32 %v1770, %v1854
        %s1859 = scalar_lea.vmem [#allocation13], 96
        %v1860 = vld [vmem:[%s1859] sm:$0xff]
        %v1861 = vld [vmem:[%s1859 + $0x8] sm:$0xff]
        %v1862 = vld [vmem:[%s1859 + $0x10] sm:$0xff]
        %v1863 = vld [vmem:[%s1859 + $0x18] sm:$0xff]
        %v1865 = vsel %vm819, %v1581, 0
        %v1868 = vsel %vm819, %v1586, 0
        %1870 = vmatprep.subr.mxu0 0.0
        %1871 = vmatpush1.msra.mxu0 0.0
        %1872 = vmatprep.subr.mxu0 0.0
        %1873 = vmatpush1.msra.mxu0 0.0
        %1874 = vmatprep.subr.mxu0 0.0
        %1875 = vmatpush1.msra.mxu0 0.0
        %1876 = vmatprep.subr.mxu0 0.0
        %1877 = vmatpush1.msra.mxu0 0.0
        %1878 = vmatprep.subr.mxu0 0.0
        %1879 = vmatpush1.msra.mxu0 0.0
        %1880 = vmatprep.subr.mxu0 0.0
        %1881 = vmatpush1.msra.mxu0 0.0
        %1882 = vmatprep.subr.mxu0 0.0
        %1883 = vmatpush1.msra.mxu0 0.0
        %1884 = vmatprep.subr.mxu0 0.0
        %1885 = vmatpush1.msra.mxu0 0.0
        %1886 = vmatprep.subr.mxu0 0.0
        %1887 = vmatpush1.msra.mxu0 0.0
        %1888 = vmatprep.subr.mxu0 0.0
        %1889 = vmatpush1.msra.mxu0 0.0
        %1890 = vmatprep.subr.mxu0 0.0
        %1891 = vmatpush1.msra.mxu0 0.0
        %1892 = vmatprep.subr.mxu0 0.0
        %1893 = vmatpush1.msra.mxu0 0.0
        %1894 = vmatprep.subr.mxu0 0.0
        %1895 = vmatpush1.msra.mxu0 %v1863
        %1896 = vmatprep.subr.mxu0 0.0
        %1897 = vmatpush1.msra.mxu0 %v1862
        %1898 = vmatprep.subr.mxu0 0.0
        %1899 = vmatpush1.msra.mxu0 %v1861
        %1900 = vmatprep.subr.mxu0 0.0
        %1901 = vmatpush1.msra.mxu0 %v1860
        %1902 = vmatprep.subr.mxu0 0.0
        %1903 = vmatpush2.msra.mxu0 0.0
        %1904 = vmatprep.subr.mxu0 0.0
        %1905 = vmatpush2.msra.mxu0 0.0
        %1906 = vmatprep.subr.mxu0 0.0
        %1907 = vmatpush2.msra.mxu0 0.0
        %1908 = vmatprep.subr.mxu0 0.0
        %1909 = vmatpush2.msra.mxu0 0.0
        %1910 = vmatprep.subr.mxu0 0.0
        %1911 = vmatpush2.msra.mxu0 0.0
        %1912 = vmatprep.subr.mxu0 0.0
        %1913 = vmatpush2.msra.mxu0 0.0
        %1914 = vmatprep.subr.mxu0 0.0
        %1915 = vmatpush2.msra.mxu0 0.0
        %1916 = vmatprep.subr.mxu0 0.0
        %1917 = vmatpush2.msra.mxu0 0.0
        %1918 = vmatprep.subr.mxu0 0.0
        %1919 = vmatpush2.msra.mxu0 0.0
        %1920 = vmatprep.subr.mxu0 0.0
        %1921 = vmatpush2.msra.mxu0 0.0
        %1922 = vmatprep.subr.mxu0 0.0
        %1923 = vmatpush2.msra.mxu0 0.0
        %1924 = vmatprep.subr.mxu0 0.0
        %1925 = vmatpush2.msra.mxu0 0.0
        %1926 = vmatprep.subr.mxu0 0.0
        %1927 = vmatpush2.msra.mxu0 0.0
        %1928 = vmatprep.subr.mxu0 0.0
        %1929 = vmatpush2.msra.mxu0 0.0
        %1930 = vmatprep.subr.mxu0 0.0
        %1931 = vmatpush2.msra.mxu0 0.0
        %1932 = vmatprep.subr.mxu0 0.0
        %1933 = vmatpush2.msra.mxu0 0.0
        %1934 = vmatprep.mubr.f32.mxu0 0.0
        %1935 = vmatmul.mubr.f32.gmra.mxu0 %v1865
        %v1936 = vpop.f32.mrf.mxu0
        %v1937 = vadd.f32 0.0, %v1936
        %v1938 = vpop.f32.mrf.mxu0
        %1939 = vmatprep.mubr.f32.mxu0 0.0
        %1940 = vmatmul.mubr.f32.gmra.mxu0 %v1868
        %v1941 = vpop.f32.mrf.mxu0
        %v1942 = vadd.f32 0.0, %v1941
        %v1943 = vpop.f32.mrf.mxu0
        %1944 = vdwg.mxu0
        %v1945 = vadd.f32 %v1857, %v1937
        %v1946 = vadd.f32 %v1858, %v1942
        %v1947 = vadd.f32 %v687, %v1945
        %v1948 = vadd.f32 %v688, %v1946
        %1949 = vst [vmem:[%s493] sm:$0xff] %v1947
        %1950 = vst [vmem:[%s493 + $0x8] sm:$0xff] %v1948
        %s1951 = sand.u32 %s261, 1
        %s1952 = scalar_lea.sflag [#allocation6], %s1951
        %s1953 = sand.u32 %s261, 1
        %s1954 = smul.addr %s1953, 16
        %s1955 = scalar_lea.vmem [#allocation15], %s1954
        // Predicated region
        $region85: #{tpu_custom_call.1} parent=55 // pred_check
          %p1956 = pneg %p271
        $region86: #{tpu_custom_call.1} parent=55 // pred_check_branch
          %1958 = sbr.rel (%p1956) target = $region88
        $region87: #{tpu_custom_call.1} parent=55 // pred_region
          %s1959 = smul.u32 2, %s36
          %s1961 = ssub.s32 256, 256
          %1962 = vsyncadd %s1952, %s1961
          %s1963 = smul.addr %s35, 2
          %s1964 = sadd.s32 %s1959, %s1963
          %s1965 = smul.addr %s1964, 128
          %s1966 = scalar_lea.hbm %s9, %s1965
          %s1967 = sshll.u32 %s1955, 4
          %s1968 = int_to_ptr.vmem [resolvable:$true] %s1967
          %1973 = dma.vmem_to_hbm [thread:$0]  %s1968, 256, %s1966, %s1952, 128, 128, 8
        $region88: #{tpu_custom_call.1} parent=55 // pred_fallthru
          _
      $region56: #{tpu_custom_call.1} parent=5 // pred_fallthru
        _
      %p1974 = scmp.le.s32.totalorder 2, %s26
      // Predicated region
      $region89: #{tpu_custom_call.1} parent=5 // pred_check
        %p1975 = pneg %p1974
      $region90: #{tpu_custom_call.1} parent=5 // pred_check_branch
        %1977 = sbr.rel (%p1975) target = $region92
      $region91: #{tpu_custom_call.1} parent=5 // pred_region
        %s1978 = ssub.s32 %s26, 2
        // Predicated region
        $region93: #{tpu_custom_call.1} parent=91 // pred_check
          %p1979 = pneg %p277
        $region94: #{tpu_custom_call.1} parent=91 // pred_check_branch
          %1981 = sbr.rel (%p1979) target = $region96
        $region95: #{tpu_custom_call.1} parent=91 // pred_region
          %s1982 = sand.u32 %s262, 1
          %s1983 = scalar_lea.sflag [#allocation6], %s1982
          %s1984 = sand.u32 %s262, 1
          %s1985 = smul.addr %s1984, 16
          %s1986 = scalar_lea.vmem [#allocation15], %s1985
          %1987 = dma.done %s1983, 256
        $region96: #{tpu_custom_call.1} parent=91 // pred_fallthru
          _
      $region92: #{tpu_custom_call.1} parent=5 // pred_fallthru
        _
    $region6: #{tpu_custom_call.1} parent=1 // loop_footer
      %s30 = sadd.s32 1, %s26
    $region7: #{tpu_custom_call.1} parent=1 // loop_footer_branch
      %25 = sbr.rel target = $region3
    $region8: #{tpu_custom_call.1} parent=1 // loop_exit
      _
    %1988 = vsyncpa [#allocation5], 1
    %s1989 = scalar_lea.sflag [#allocation5], 1
    %1990 = vsyncpa %s1989, 1
    %1991 = vsyncpa [#allocation8], 1
    %s1992 = scalar_lea.sflag [#allocation8], 1
    %1993 = vsyncpa %s1992, 1
    %1994 = vsyncpa [#allocation11], 1
    %1995 = vsyncpa [#allocation14], 1
    %1996 = vsyncpa [#allocation6], 1
    %s1997 = scalar_lea.sflag [#allocation6], 1
    %1998 = vsyncpa %s1997, 1

</llo_original>
